<compile_context>
chip_gen: v7x
topology: tpu7x:2x2x1
jax: 0.10.0
libtpu: 0.0.40
codegen_flags: <defaults>
</compile_context>

<pallas_src>
import functools
import math

import jax
import jax.numpy as jnp
from jax.experimental import pallas as pl
from jax.experimental.pallas import tpu as pltpu

_VMEM_LIMIT = 32 * 1024 * 1024  # explicit scoped-VMEM budget (portable v5e/v6e/v7x)


# ----------------------------- tile selection ------------------------------ #

def _pick_tile(dim, desired, align):
    """Largest tile <= desired that divides dim and is align-aligned, else full dim."""
    if dim <= desired:
        return dim
    t = (desired // align) * align
    while t >= align:
        if dim % t == 0:
            return t
        t -= align
    return dim


# ----------------------------- linear (matmul) ------------------------------ #

def _linear_kernel(x_ref, w_ref, b_ref, o_ref, *, activation):
    y = jnp.dot(x_ref[...], w_ref[...], preferred_element_type=jnp.float32)
    y = y + b_ref[...]
    if activation == "gelu":
        # TODO(synk): HF BERT uses exact erf-GELU; tanh approximation used here.
        c = 0.7978845608028654  # sqrt(2/pi)
        y = 0.5 * y * (1.0 + jnp.tanh(c * (y + 0.044715 * y * y * y)))
    elif activation == "tanh":
        y = jnp.tanh(y)
    o_ref[...] = y.astype(o_ref.dtype)


def linear(x, w, b, activation="none", *, tm=512, tn=1536, out_dtype=jnp.bfloat16):
    """act(x @ w + b).  x:[M,K] bf16, w:[K,N] bf16, b:[N] f32 -> [M,N] out_dtype.

    Full-K tiles (every BERT-base weight strip fits VMEM in bf16); grid ordered
    (N-tiles, M-tiles) so the resident weight strip is fetched once per N strip.
    """
    M, K = x.shape
    N = w.shape[1]
    tm = _pick_tile(M, tm, 8)
    tn = _pick_tile(N, tn, 128)
    grid = (N // tn, M // tm)
    return pl.pallas_call(
        functools.partial(_linear_kernel, activation=activation),
        out_shape=jax.ShapeDtypeStruct((M, N), out_dtype),
        grid=grid,
        in_specs=[
            pl.BlockSpec((tm, K), lambda j, i: (i, 0)),
            pl.BlockSpec((K, tn), lambda j, i: (0, j)),   # constant along inner axis
            pl.BlockSpec((1, tn), lambda j, i: (0, j)),
        ],
        out_specs=pl.BlockSpec((tm, tn), lambda j, i: (i, j)),
        compiler_params=pltpu.CompilerParams(
            dimension_semantics=("parallel", "parallel"),
            vmem_limit_bytes=_VMEM_LIMIT),
    )(x, w, b.reshape(1, N))


# ------------------- linear + residual-add + LayerNorm ---------------------- #

def _linear_add_ln_kernel(x_ref, w_ref, b_ref, res_ref, g_ref, bln_ref, o_ref):
    y = jnp.dot(x_ref[...], w_ref[...], preferred_element_type=jnp.float32)
    y = y + b_ref[...] + res_ref[...].astype(jnp.float32)
    mean = jnp.mean(y, axis=-1, keepdims=True)
    var = jnp.mean((y - mean) * (y - mean), axis=-1, keepdims=True)
    o_ref[...] = ((y - mean) * jax.lax.rsqrt(var + 1e-12) * g_ref[...]
                  + bln_ref[...]).astype(o_ref.dtype)


def linear_add_layernorm(x, w, b, residual, gamma, beta, *, tm=512,
                         out_dtype=jnp.bfloat16):
    """LayerNorm((x @ w + b) + residual), fused into the matmul epilogue (tn == N)."""
    M, K = x.shape
    N = w.shape[1]
    tm = _pick_tile(M, tm, 8)
    return pl.pallas_call(
        _linear_add_ln_kernel,
        out_shape=jax.ShapeDtypeStruct((M, N), out_dtype),
        grid=(M // tm,),
        in_specs=[
            pl.BlockSpec((tm, K), lambda i: (i, 0)),
            pl.BlockSpec((K, N), lambda i: (0, 0)),       # weight resident in VMEM
            pl.BlockSpec((1, N), lambda i: (0, 0)),
            pl.BlockSpec((tm, N), lambda i: (i, 0)),
            pl.BlockSpec((1, N), lambda i: (0, 0)),
            pl.BlockSpec((1, N), lambda i: (0, 0)),
        ],
        out_specs=pl.BlockSpec((tm, N), lambda i: (i, 0)),
        compiler_params=pltpu.CompilerParams(
            dimension_semantics=("parallel",),
            vmem_limit_bytes=_VMEM_LIMIT),
    )(x, w, b.reshape(1, N), residual, gamma.reshape(1, N), beta.reshape(1, N))


# ------------------------------- LayerNorm ---------------------------------- #

def _layernorm_kernel(x_ref, g_ref, b_ref, o_ref):
    h = x_ref[...].astype(jnp.float32)
    mean = jnp.mean(h, axis=-1, keepdims=True)
    var = jnp.mean((h - mean) * (h - mean), axis=-1, keepdims=True)
    o_ref[...] = ((h - mean) * jax.lax.rsqrt(var + 1e-12) * g_ref[...]
                  + b_ref[...]).astype(o_ref.dtype)


def layernorm(x, gamma, beta, *, tm=512, out_dtype=jnp.bfloat16):
    M, H = x.shape
    tm = _pick_tile(M, tm, 8)
    return pl.pallas_call(
        _layernorm_kernel,
        out_shape=jax.ShapeDtypeStruct((M, H), out_dtype),
        grid=(M // tm,),
        in_specs=[
            pl.BlockSpec((tm, H), lambda i: (i, 0)),
            pl.BlockSpec((1, H), lambda i: (0, 0)),
            pl.BlockSpec((1, H), lambda i: (0, 0)),
        ],
        out_specs=pl.BlockSpec((tm, H), lambda i: (i, 0)),
        compiler_params=pltpu.CompilerParams(
            dimension_semantics=("parallel",),
            vmem_limit_bytes=_VMEM_LIMIT),
    )(x, gamma.reshape(1, H), beta.reshape(1, H))


# -------------------------- flash-style attention --------------------------- #

def _flash_attn_kernel(q_ref, k_ref, v_ref, m_ref, o_ref,
                       m_scr, l_scr, acc_scr, *, scale):
    """Online-softmax attention, all heads of one batch element per grid step.
       q:[1,nH,S,dh]  k,v:[1,nH,tkv,dh]  m:[1,1,tkv] additive  o:[1,nH,S,dh]"""
    ki = pl.program_id(1)

    @pl.when(ki == 0)
    def _():
        m_scr[...] = jnp.full_like(m_scr, -jnp.inf)
        l_scr[...] = jnp.zeros_like(l_scr)
        acc_scr[...] = jnp.zeros_like(acc_scr)

    q = q_ref[0] * scale                                   # bf16, scale folded once
    s = jnp.einsum("hqd,hkd->hqk", q, k_ref[0],
                   preferred_element_type=jnp.float32)     # [nH, S, tkv] f32
    s = s + m_ref[0]                                       # [1, tkv] broadcast

    m_new = jnp.maximum(m_scr[...], jnp.max(s, axis=-1, keepdims=True))
    alpha = jnp.exp(m_scr[...] - m_new)
    p = jnp.exp(s - m_new)
    l_scr[...] = alpha * l_scr[...] + jnp.sum(p, axis=-1, keepdims=True)
    acc_scr[...] = alpha * acc_scr[...] + jnp.einsum(
        "hqk,hkd->hqd", p.astype(jnp.bfloat16), v_ref[0],
        preferred_element_type=jnp.float32)
    m_scr[...] = m_new

    @pl.when(ki == pl.num_programs(1) - 1)
    def _():
        o_ref[0] = (acc_scr[...] / l_scr[...]).astype(o_ref.dtype)


def attention(q, k, v, mask_bias, scale, *, tkv=512):
    """q,k,v: [B, nH, S, dh] bf16.  mask_bias: [B, 1, S] additive f32."""
    B, nH, S, dh = q.shape
    tkv = _pick_tile(S, tkv, 128)
    grid = (B, S // tkv)
    return pl.pallas_call(
        functools.partial(_flash_attn_kernel, scale=scale),
        out_shape=jax.ShapeDtypeStruct((B, nH, S, dh), jnp.bfloat16),
        grid=grid,
        in_specs=[
            pl.BlockSpec((1, nH, S, dh), lambda b, ki: (b, 0, 0, 0)),
            pl.BlockSpec((1, nH, tkv, dh), lambda b, ki: (b, 0, ki, 0)),
            pl.BlockSpec((1, nH, tkv, dh), lambda b, ki: (b, 0, ki, 0)),
            # mask shared across heads: one [1, 1, tkv] block per batch element
            pl.BlockSpec((1, 1, tkv), lambda b, ki: (b, 0, ki)),
        ],
        out_specs=pl.BlockSpec((1, nH, S, dh), lambda b, ki: (b, 0, 0, 0)),
        scratch_shapes=[
            pltpu.VMEM((nH, S, 1), jnp.float32),    # running max m
            pltpu.VMEM((nH, S, 1), jnp.float32),    # running sum l
            pltpu.VMEM((nH, S, dh), jnp.float32),   # output accumulator
        ],
        compiler_params=pltpu.CompilerParams(
            dimension_semantics=("parallel", "arbitrary"),
            vmem_limit_bytes=_VMEM_LIMIT),
    )(q, k, v, mask_bias)


# ------------------------------ model forward ------------------------------ #

def bert_classifier_forward(params, input_ids, attention_mask, *, cfg):
    B, S = input_ids.shape
    H, nH = cfg["hidden"], cfg["heads"]
    dh = H // nH
    scale = 1.0 / math.sqrt(dh)

    # Embeddings (gather is JAX glue), then LayerNorm in Pallas (bf16 out).
    # TODO(synk): token_type_ids hardcoded to segment 0 (single-segment inputs).
    emb = (jnp.take(params["word_emb"], input_ids, axis=0)
           + params["pos_emb"][None, :S, :]
           + params["type_emb"][0][None, None, :])
    x = layernorm(emb.reshape(B * S, H), params["emb_ln_g"], params["emb_ln_b"])

    # Additive attention mask, kept at [B, 1, S]; broadcast per head in-kernel.
    mask_bias = ((1.0 - attention_mask.astype(jnp.float32)) * -10000.0)[:, None, :]

    for layer in params["layers"]:
        # --- self attention: fused QKV projection (one matmul, [B*S, 3H]) ---
        qkv = linear(x, layer["qkv_w"], layer["qkv_b"])
        # TODO(synk): head split/merge kept as XLA transposes; direct BlockSpec
        # column indexing needs dh to be a multiple of 128 (BERT-base dh=64).
        qkv = qkv.reshape(B, S, 3, nH, dh).transpose(2, 0, 3, 1, 4)  # [3,B,nH,S,dh]
        ctx = attention(qkv[0], qkv[1], qkv[2], mask_bias, scale)
        ctx = ctx.transpose(0, 2, 1, 3).reshape(B * S, H)
        # attention output projection + residual add + LayerNorm, fused
        x = linear_add_layernorm(ctx, layer["ao_w"], layer["ao_b"], x,
                                 layer["attn_ln_g"], layer["attn_ln_b"])

        # --- feed forward: up-proj + GELU, down-proj with fused add + LN ---
        h = linear(x, layer["ff_w1"], layer["ff_b1"], activation="gelu")
        x = linear_add_layernorm(h, layer["ff_w2"], layer["ff_b2"], x,
                                 layer["ffn_ln_g"], layer["ffn_ln_b"])

    # Pooler: tanh(dense(CLS token)).
    cls = x.reshape(B, S, H)[:, 0, :]
    pooled = linear(cls, params["pool_w"], params["pool_b"], activation="tanh")

    # Dropout(0.1) -> identity at inference. Classifier weight padded to a
    # lane-dense 128-wide output; slice back to num_classes here.
    logits = linear(pooled, params["fc_w"], params["fc_b"],
                    out_dtype=jnp.float32)[:, :cfg["num_classes"]]
    return logits


# --------------------------- parameter construction ------------------------- #

def init_params(key, cfg):
    H, I = cfg["hidden"], cfg["intermediate"]
    V, P, C = cfg["vocab"], cfg["max_pos"], cfg["num_classes"]
    Cpad = max(128, ((C + 127) // 128) * 128)

    def nrm(key, shape, dtype=jnp.bfloat16):
        return (0.02 * jax.random.normal(key, shape, dtype=jnp.float32)).astype(dtype)

    keys = iter(jax.random.split(key, 16 + 8 * cfg["layers"]))

    fc_w = jnp.zeros((H, Cpad), jnp.bfloat16).at[:, :C].set(nrm(next(keys), (H, C)))

    params = {
        # Embedding tables stay f32 (JAX gather glue, then Pallas LN -> bf16).
        "word_emb": nrm(next(keys), (V, H), jnp.float32),
        "pos_emb": nrm(next(keys), (P, H), jnp.float32),
        "type_emb": nrm(next(keys), (2, H), jnp.float32),
        "emb_ln_g": jnp.ones((H,), jnp.float32),
        "emb_ln_b": jnp.zeros((H,), jnp.float32),
        # Dense weights bf16 (MXU operands); biases / LN params f32.
        "pool_w": nrm(next(keys), (H, H)),
        "pool_b": jnp.zeros((H,), jnp.float32),
        "fc_w": fc_w,
        "fc_b": jnp.zeros((Cpad,), jnp.float32),
        "layers": [],
    }
    for _ in range(cfg["layers"]):
        q_w = nrm(next(keys), (H, H))
        k_w = nrm(next(keys), (H, H))
        v_w = nrm(next(keys), (H, H))
        params["layers"].append({
            "qkv_w": jnp.concatenate([q_w, k_w, v_w], axis=1),      # [H, 3H] bf16
            "qkv_b": jnp.zeros((3 * H,), jnp.float32),
            "ao_w": nrm(next(keys), (H, H)),
            "ao_b": jnp.zeros((H,), jnp.float32),
            "attn_ln_g": jnp.ones((H,), jnp.float32),
            "attn_ln_b": jnp.zeros((H,), jnp.float32),
            "ff_w1": nrm(next(keys), (H, I)),
            "ff_b1": jnp.zeros((I,), jnp.float32),
            "ff_w2": nrm(next(keys), (I, H)),
            "ff_b2": jnp.zeros((H,), jnp.float32),
            "ffn_ln_g": jnp.ones((H,), jnp.float32),
            "ffn_ln_b": jnp.zeros((H,), jnp.float32),
        })
    return params


# ----------------------------------- main ----------------------------------- #

if __name__ == "__main__":
    cfg = dict(hidden=32, heads=2, intermediate=64, layers=2,
               vocab=100, max_pos=16, num_classes=3)

    root = jax.random.PRNGKey(0)
    k_param, k_ids = jax.random.split(root)

    params = init_params(k_param, cfg)

    B, S = 2, 8
    input_ids = jax.random.randint(k_ids, (B, S), 0, cfg["vocab"], dtype=jnp.int32)
    attention_mask = jnp.array([[1] * S,
                                [1] * (S - 2) + [0] * 2], dtype=jnp.int32)

    fwd = jax.jit(functools.partial(bert_classifier_forward, cfg=cfg))
    logits = fwd(params, input_ids, attention_mask)
    jax.block_until_ready(logits)

    assert logits.shape == (B, cfg["num_classes"])
    assert bool(jnp.all(jnp.isfinite(logits)))
    print("KERNEL_OK")
</pallas_src>

<mosaic_0001>
module attributes {stable_mosaic.version = 11 : i64} {
  func.func @_linear_kernel(%arg0: i32, %arg1: i32, %arg2: memref<16x32xbf16, #tpu.memory_space<vmem>>, %arg3: memref<32x96xbf16, #tpu.memory_space<vmem>>, %arg4: memref<1x96xf32, #tpu.memory_space<vmem>>, %arg5: memref<16x96xbf16, #tpu.memory_space<vmem>>) attributes {dimension_semantics = [#tpu.dimension_semantics<parallel>, #tpu.dimension_semantics<parallel>], iteration_bounds = array<i64: 1, 1>, scalar_prefetch = 0 : i64, scratch_operands = 0 : i64, tpu.core_type = #tpu.core_type<tc>, window_params = [{transform_indices = @transform_0, window_bounds = array<i64: 16, 32>}, {transform_indices = @transform_1, window_bounds = array<i64: 32, 96>}, {transform_indices = @transform_2, window_bounds = array<i64: 1, 96>}, {transform_indices = @transform_3, window_bounds = array<i64: 16, 96>}]} {
    %c0 = arith.constant 0 : index
    %c0_0 = arith.constant 0 : index
    %0 = vector.load %arg2[%c0, %c0_0] : memref<16x32xbf16, #tpu.memory_space<vmem>>, vector<16x32xbf16>
    %c0_1 = arith.constant 0 : index
    %c0_2 = arith.constant 0 : index
    %1 = vector.load %arg3[%c0_1, %c0_2] : memref<32x96xbf16, #tpu.memory_space<vmem>>, vector<32x96xbf16>
    %cst = arith.constant dense<0.000000e+00> : vector<16x96xf32>
    %2 = tpu.matmul %0, %1, %cst {dimension_numbers = #tpu.dot_dimension_numbers<[1], [0], [0], [1], [0, 0, 1, 1], [], []>} : vector<16x32xbf16>, vector<32x96xbf16>, vector<16x96xf32> -> vector<16x96xf32>
    %c0_3 = arith.constant 0 : index
    %c0_4 = arith.constant 0 : index
    %3 = vector.load %arg4[%c0_3, %c0_4] : memref<1x96xf32, #tpu.memory_space<vmem>>, vector<1x96xf32>
    %4 = vector.broadcast %3 : vector<1x96xf32> to vector<16x96xf32>
    %5 = arith.addf %2, %4 : vector<16x96xf32>
    %6 = arith.truncf %5 : vector<16x96xf32> to vector<16x96xbf16>
    %c0_5 = arith.constant 0 : index
    %c0_6 = arith.constant 0 : index
    %7 = vector.load %arg5[%c0_5, %c0_6] : memref<16x96xbf16, #tpu.memory_space<vmem>>, vector<16x96xbf16>
    tpu.vector_store %arg5[%c0_5, %c0_6], %6 {strides = array<i32>} : memref<16x96xbf16, #tpu.memory_space<vmem>>, vector<16x96xbf16>,
    return
  }
  func.func @transform_0(%arg0: i32, %arg1: i32) -> (i32, i32) {
    %c0_i32 = arith.constant 0 : i32
    %c0_i32_0 = arith.constant 0 : i32
    return %arg1, %c0_i32 : i32, i32
  }
  func.func @transform_1(%arg0: i32, %arg1: i32) -> (i32, i32) {
    %c0_i32 = arith.constant 0 : i32
    %c0_i32_0 = arith.constant 0 : i32
    return %c0_i32, %arg0 : i32, i32
  }
  func.func @transform_2(%arg0: i32, %arg1: i32) -> (i32, i32) {
    %c0_i32 = arith.constant 0 : i32
    %c0_i32_0 = arith.constant 0 : i32
    return %c0_i32, %arg0 : i32, i32
  }
  func.func @transform_3(%arg0: i32, %arg1: i32) -> (i32, i32) {
    %c0_i32 = arith.constant 0 : i32
    return %arg1, %arg0 : i32, i32
  }
}

module attributes {stable_mosaic.version = 11 : i64} {
  func.func @_layernorm_kernel(%arg0: i32, %arg1: memref<16x32xf32, #tpu.memory_space<vmem>>, %arg2: memref<1x32xf32, #tpu.memory_space<vmem>>, %arg3: memref<1x32xf32, #tpu.memory_space<vmem>>, %arg4: memref<16x32xbf16, #tpu.memory_space<vmem>>) attributes {dimension_semantics = [#tpu.dimension_semantics<parallel>], iteration_bounds = array<i64: 1>, scalar_prefetch = 0 : i64, scratch_operands = 0 : i64, tpu.core_type = #tpu.core_type<tc>, window_params = [{transform_indices = @transform_0, window_bounds = array<i64: 16, 32>}, {pipeline_mode = #tpu.pipeline_mode<synchronous>, transform_indices = @transform_1, window_bounds = array<i64: 1, 32>}, {pipeline_mode = #tpu.pipeline_mode<synchronous>, transform_indices = @transform_2, window_bounds = array<i64: 1, 32>}, {transform_indices = @transform_3, window_bounds = array<i64: 16, 32>}]} {
    %c0 = arith.constant 0 : index
    %c0_0 = arith.constant 0 : index
    %0 = vector.load %arg1[%c0, %c0_0] : memref<16x32xf32, #tpu.memory_space<vmem>>, vector<16x32xf32>
    %cst = arith.constant dense<0.000000e+00> : vector<16xf32>
    %1 = vector.multi_reduction <add>, %0, %cst [1] : vector<16x32xf32> to vector<16xf32>
    %2 = vector.shape_cast %1 : vector<16xf32> to vector<16x1xf32>
    %cst_1 = arith.constant 3.200000e+01 : f32
    %3 = vector.broadcast %cst_1 : f32 to vector<16x1xf32>
    %4 = arith.divf %2, %3 : vector<16x1xf32>
    %5 = vector.broadcast %4 : vector<16x1xf32> to vector<16x32xf32>
    %6 = arith.subf %0, %5 : vector<16x32xf32>
    %7 = vector.broadcast %4 : vector<16x1xf32> to vector<16x32xf32>
    %8 = arith.subf %0, %7 : vector<16x32xf32>
    %9 = arith.mulf %6, %8 : vector<16x32xf32>
    %cst_2 = arith.constant dense<0.000000e+00> : vector<16xf32>
    %10 = vector.multi_reduction <add>, %9, %cst_2 [1] : vector<16x32xf32> to vector<16xf32>
    %11 = vector.shape_cast %10 : vector<16xf32> to vector<16x1xf32>
    %cst_3 = arith.constant 3.200000e+01 : f32
    %12 = vector.broadcast %cst_3 : f32 to vector<16x1xf32>
    %13 = arith.divf %11, %12 : vector<16x1xf32>
    %14 = vector.broadcast %4 : vector<16x1xf32> to vector<16x32xf32>
    %15 = arith.subf %0, %14 : vector<16x32xf32>
    %cst_4 = arith.constant 9.99999996E-13 : f32
    %16 = vector.broadcast %cst_4 : f32 to vector<16x1xf32>
    %17 = arith.addf %13, %16 : vector<16x1xf32>
    %18 = math.rsqrt %17 : vector<16x1xf32>
    %19 = vector.broadcast %18 : vector<16x1xf32> to vector<16x32xf32>
    %20 = arith.mulf %15, %19 : vector<16x32xf32>
    %c0_5 = arith.constant 0 : index
    %c0_6 = arith.constant 0 : index
    %21 = vector.load %arg2[%c0_5, %c0_6] : memref<1x32xf32, #tpu.memory_space<vmem>>, vector<1x32xf32>
    %22 = vector.broadcast %21 : vector<1x32xf32> to vector<16x32xf32>
    %23 = arith.mulf %20, %22 : vector<16x32xf32>
    %c0_7 = arith.constant 0 : index
    %c0_8 = arith.constant 0 : index
    %24 = vector.load %arg3[%c0_7, %c0_8] : memref<1x32xf32, #tpu.memory_space<vmem>>, vector<1x32xf32>
    %25 = vector.broadcast %24 : vector<1x32xf32> to vector<16x32xf32>
    %26 = arith.addf %23, %25 : vector<16x32xf32>
    %27 = arith.truncf %26 : vector<16x32xf32> to vector<16x32xbf16>
    %c0_9 = arith.constant 0 : index
    %c0_10 = arith.constant 0 : index
    %28 = vector.load %arg4[%c0_9, %c0_10] : memref<16x32xbf16, #tpu.memory_space<vmem>>, vector<16x32xbf16>
    tpu.vector_store %arg4[%c0_9, %c0_10], %27 {strides = array<i32>} : memref<16x32xbf16, #tpu.memory_space<vmem>>, vector<16x32xbf16>,
    return
  }
  func.func @transform_0(%arg0: i32) -> (i32, i32) {
    %c0_i32 = arith.constant 0 : i32
    %c0_i32_0 = arith.constant 0 : i32
    return %arg0, %c0_i32 : i32, i32
  }
  func.func @transform_1(%arg0: i32) -> (i32, i32) {
    %c0_i32 = arith.constant 0 : i32
    %c0_i32_0 = arith.constant 0 : i32
    %c0_i32_1 = arith.constant 0 : i32
    return %c0_i32, %c0_i32_0 : i32, i32
  }
  func.func @transform_2(%arg0: i32) -> (i32, i32) {
    %c0_i32 = arith.constant 0 : i32
    %c0_i32_0 = arith.constant 0 : i32
    %c0_i32_1 = arith.constant 0 : i32
    return %c0_i32, %c0_i32_0 : i32, i32
  }
  func.func @transform_3(%arg0: i32) -> (i32, i32) {
    %c0_i32 = arith.constant 0 : i32
    %c0_i32_0 = arith.constant 0 : i32
    return %arg0, %c0_i32 : i32, i32
  }
}

module attributes {stable_mosaic.version = 11 : i64} {
  func.func @_flash_attn_kernel(%arg0: i32, %arg1: i32, %arg2: memref<1x2x8x16xbf16, #tpu.memory_space<vmem>>, %arg3: memref<1x2x8x16xbf16, #tpu.memory_space<vmem>>, %arg4: memref<1x2x8x16xbf16, #tpu.memory_space<vmem>>, %arg5: memref<1x1x8xf32, #tpu.memory_space<vmem>>, %arg6: memref<1x2x8x16xbf16, #tpu.memory_space<vmem>>, %arg7: memref<2x8x1xf32, #tpu.memory_space<vmem>>, %arg8: memref<2x8x1xf32, #tpu.memory_space<vmem>>, %arg9: memref<2x8x16xf32, #tpu.memory_space<vmem>>) attributes {dimension_semantics = [#tpu.dimension_semantics<parallel>, #tpu.dimension_semantics<arbitrary>], iteration_bounds = array<i64: 2, 1>, scalar_prefetch = 0 : i64, scratch_operands = 3 : i64, tpu.core_type = #tpu.core_type<tc>, window_params = [{transform_indices = @transform_0, window_bounds = array<i64: 1, 2, 8, 16>}, {transform_indices = @transform_1, window_bounds = array<i64: 1, 2, 8, 16>}, {transform_indices = @transform_2, window_bounds = array<i64: 1, 2, 8, 16>}, {transform_indices = @transform_3, window_bounds = array<i64: 1, 1, 8>}, {transform_indices = @transform_4, window_bounds = array<i64: 1, 2, 8, 16>}]} {
    %c0_i32 = arith.constant 0 : i32
    %0 = arith.cmpi eq, %arg1, %c0_i32 : i32
    %1 = arith.extui %0 : i1 to i32
    %c0_i32_0 = arith.constant 0 : i32
    %2 = arith.cmpi ne, %1, %c0_i32_0 : i32
    scf.if %2 {
      %cst_42 = arith.constant 0xFF800000 : f32
      %44 = vector.broadcast %cst_42 : f32 to vector<2x8x1xf32>
      %c0_43 = arith.constant 0 : index
      %c0_44 = arith.constant 0 : index
      %c0_45 = arith.constant 0 : index
      %45 = vector.load %arg7[%c0_43, %c0_44, %c0_45] : memref<2x8x1xf32, #tpu.memory_space<vmem>>, vector<2x8x1xf32>
      tpu.vector_store %arg7[%c0_43, %c0_44, %c0_45], %44 {strides = array<i32>} : memref<2x8x1xf32, #tpu.memory_space<vmem>>, vector<2x8x1xf32>,
      %cst_46 = arith.constant 0.000000e+00 : f32
      %46 = vector.broadcast %cst_46 : f32 to vector<2x8x1xf32>
      %c0_47 = arith.constant 0 : index
      %c0_48 = arith.constant 0 : index
      %c0_49 = arith.constant 0 : index
      %47 = vector.load %arg8[%c0_47, %c0_48, %c0_49] : memref<2x8x1xf32, #tpu.memory_space<vmem>>, vector<2x8x1xf32>
      tpu.vector_store %arg8[%c0_47, %c0_48, %c0_49], %46 {strides = array<i32>} : memref<2x8x1xf32, #tpu.memory_space<vmem>>, vector<2x8x1xf32>,
      %cst_50 = arith.constant 0.000000e+00 : f32
      %48 = vector.broadcast %cst_50 : f32 to vector<2x8x16xf32>
      %c0_51 = arith.constant 0 : index
      %c0_52 = arith.constant 0 : index
      %c0_53 = arith.constant 0 : index
      %49 = vector.load %arg9[%c0_51, %c0_52, %c0_53] : memref<2x8x16xf32, #tpu.memory_space<vmem>>, vector<2x8x16xf32>
      tpu.vector_store %arg9[%c0_51, %c0_52, %c0_53], %48 {strides = array<i32>} : memref<2x8x16xf32, #tpu.memory_space<vmem>>, vector<2x8x16xf32>,
    } else {
    }
    %c0 = arith.constant 0 : index
    %c0_1 = arith.constant 0 : index
    %c0_2 = arith.constant 0 : index
    %c0_3 = arith.constant 0 : index
    %3 = vector.load %arg2[%c0, %c0_1, %c0_2, %c0_3] : memref<1x2x8x16xbf16, #tpu.memory_space<vmem>>, vector<1x2x8x16xbf16>
    %4 = vector.shape_cast %3 : vector<1x2x8x16xbf16> to vector<2x8x16xbf16>
    %cst = arith.constant 2.500000e-01 : bf16
    %5 = vector.broadcast %cst : bf16 to vector<2x8x16xbf16>
    %6 = arith.mulf %4, %5 : vector<2x8x16xbf16>
    %c0_4 = arith.constant 0 : index
    %c0_5 = arith.constant 0 : index
    %c0_6 = arith.constant 0 : index
    %c0_7 = arith.constant 0 : index
    %7 = vector.load %arg3[%c0_4, %c0_5, %c0_6, %c0_7] : memref<1x2x8x16xbf16, #tpu.memory_space<vmem>>, vector<1x2x8x16xbf16>
    %8 = vector.shape_cast %7 : vector<1x2x8x16xbf16> to vector<2x8x16xbf16>
    "tpu.trace_start"() <{level = 10 : i32, message = "hqd,hkd->hqk"}> : () -> ()
    %cst_8 = arith.constant dense<0.000000e+00> : vector<2x8x8xf32>
    %9 = tpu.matmul %6, %8, %cst_8 {dimension_numbers = #tpu.dot_dimension_numbers<[2], [2], [1], [1], [0, 0, 0, 1, 1, 1], [0], [0]>} : vector<2x8x16xbf16>, vector<2x8x16xbf16>, vector<2x8x8xf32> -> vector<2x8x8xf32>
    "tpu.trace_stop"() : () -> ()
    %c0_9 = arith.constant 0 : index
    %c0_10 = arith.constant 0 : index
    %c0_11 = arith.constant 0 : index
    %10 = vector.load %arg5[%c0_9, %c0_10, %c0_11] : memref<1x1x8xf32, #tpu.memory_space<vmem>>, vector<1x1x8xf32>
    %11 = vector.shape_cast %10 : vector<1x1x8xf32> to vector<1x8xf32>
    %12 = vector.shape_cast %11 : vector<1x8xf32> to vector<1x1x8xf32>
    %13 = vector.broadcast %12 : vector<1x1x8xf32> to vector<2x8x8xf32>
    %14 = arith.addf %9, %13 : vector<2x8x8xf32>
    %c0_12 = arith.constant 0 : index
    %c0_13 = arith.constant 0 : index
    %c0_14 = arith.constant 0 : index
    %15 = vector.load %arg7[%c0_12, %c0_13, %c0_14] : memref<2x8x1xf32, #tpu.memory_space<vmem>>, vector<2x8x1xf32>
    %cst_15 = arith.constant dense<0xFF800000> : vector<2x8xf32>
    %16 = vector.multi_reduction <maximumf>, %14, %cst_15 [2] : vector<2x8x8xf32> to vector<2x8xf32>
    %17 = vector.shape_cast %16 : vector<2x8xf32> to vector<2x8x1xf32>
    %18 = arith.maximumf %15, %17 : vector<2x8x1xf32>
    %c0_16 = arith.constant 0 : index
    %c0_17 = arith.constant 0 : index
    %c0_18 = arith.constant 0 : index
    %19 = vector.load %arg7[%c0_16, %c0_17, %c0_18] : memref<2x8x1xf32, #tpu.memory_space<vmem>>, vector<2x8x1xf32>
    %20 = arith.subf %19, %18 : vector<2x8x1xf32>
    %21 = math.exp %20 : vector<2x8x1xf32>
    %22 = vector.broadcast %18 : vector<2x8x1xf32> to vector<2x8x8xf32>
    %23 = arith.subf %14, %22 : vector<2x8x8xf32>
    %24 = math.exp %23 : vector<2x8x8xf32>
    %c0_19 = arith.constant 0 : index
    %c0_20 = arith.constant 0 : index
    %c0_21 = arith.constant 0 : index
    %25 = vector.load %arg8[%c0_19, %c0_20, %c0_21] : memref<2x8x1xf32, #tpu.memory_space<vmem>>, vector<2x8x1xf32>
    %26 = arith.mulf %21, %25 : vector<2x8x1xf32>
    %cst_22 = arith.constant dense<0.000000e+00> : vector<2x8xf32>
    %27 = vector.multi_reduction <add>, %24, %cst_22 [2] : vector<2x8x8xf32> to vector<2x8xf32>
    %28 = vector.shape_cast %27 : vector<2x8xf32> to vector<2x8x1xf32>
    %29 = arith.addf %26, %28 : vector<2x8x1xf32>
    %c0_23 = arith.constant 0 : index
    %c0_24 = arith.constant 0 : index
    %c0_25 = arith.constant 0 : index
    %30 = vector.load %arg8[%c0_23, %c0_24, %c0_25] : memref<2x8x1xf32, #tpu.memory_space<vmem>>, vector<2x8x1xf32>
    tpu.vector_store %arg8[%c0_23, %c0_24, %c0_25], %29 {strides = array<i32>} : memref<2x8x1xf32, #tpu.memory_space<vmem>>, vector<2x8x1xf32>,
    %c0_26 = arith.constant 0 : index
    %c0_27 = arith.constant 0 : index
    %c0_28 = arith.constant 0 : index
    %31 = vector.load %arg9[%c0_26, %c0_27, %c0_28] : memref<2x8x16xf32, #tpu.memory_space<vmem>>, vector<2x8x16xf32>
    %32 = vector.broadcast %21 : vector<2x8x1xf32> to vector<2x8x16xf32>
    %33 = arith.mulf %32, %31 : vector<2x8x16xf32>
    %34 = arith.truncf %24 : vector<2x8x8xf32> to vector<2x8x8xbf16>
    %c0_29 = arith.constant 0 : index
    %c0_30 = arith.constant 0 : index
    %c0_31 = arith.constant 0 : index
    %c0_32 = arith.constant 0 : index
    %35 = vector.load %arg4[%c0_29, %c0_30, %c0_31, %c0_32] : memref<1x2x8x16xbf16, #tpu.memory_space<vmem>>, vector<1x2x8x16xbf16>
    %36 = vector.shape_cast %35 : vector<1x2x8x16xbf16> to vector<2x8x16xbf16>
    "tpu.trace_start"() <{level = 10 : i32, message = "hqk,hkd->hqd"}> : () -> ()
    %cst_33 = arith.constant dense<0.000000e+00> : vector<2x8x16xf32>
    %37 = tpu.matmul %34, %36, %cst_33 {dimension_numbers = #tpu.dot_dimension_numbers<[2], [1], [1], [2], [0, 0, 0, 1, 1, 2], [0], [0]>} : vector<2x8x8xbf16>, vector<2x8x16xbf16>, vector<2x8x16xf32> -> vector<2x8x16xf32>
    "tpu.trace_stop"() : () -> ()
    %38 = arith.addf %33, %37 : vector<2x8x16xf32>
    %c0_34 = arith.constant 0 : index
    %c0_35 = arith.constant 0 : index
    %c0_36 = arith.constant 0 : index
    %39 = vector.load %arg9[%c0_34, %c0_35, %c0_36] : memref<2x8x16xf32, #tpu.memory_space<vmem>>, vector<2x8x16xf32>
    tpu.vector_store %arg9[%c0_34, %c0_35, %c0_36], %38 {strides = array<i32>} : memref<2x8x16xf32, #tpu.memory_space<vmem>>, vector<2x8x16xf32>,
    %c0_37 = arith.constant 0 : index
    %c0_38 = arith.constant 0 : index
    %c0_39 = arith.constant 0 : index
    %40 = vector.load %arg7[%c0_37, %c0_38, %c0_39] : memref<2x8x1xf32, #tpu.memory_space<vmem>>, vector<2x8x1xf32>
    tpu.vector_store %arg7[%c0_37, %c0_38, %c0_39], %18 {strides = array<i32>} : memref<2x8x1xf32, #tpu.memory_space<vmem>>, vector<2x8x1xf32>,
    %c0_i32_40 = arith.constant 0 : i32
    %41 = arith.cmpi eq, %arg1, %c0_i32_40 : i32
    %42 = arith.extui %41 : i1 to i32
    %c0_i32_41 = arith.constant 0 : i32
    %43 = arith.cmpi ne, %42, %c0_i32_41 : i32
    scf.if %43 {
      %c0_42 = arith.constant 0 : index
      %c0_43 = arith.constant 0 : index
      %c0_44 = arith.constant 0 : index
      %44 = vector.load %arg9[%c0_42, %c0_43, %c0_44] : memref<2x8x16xf32, #tpu.memory_space<vmem>>, vector<2x8x16xf32>
      %c0_45 = arith.constant 0 : index
      %c0_46 = arith.constant 0 : index
      %c0_47 = arith.constant 0 : index
      %45 = vector.load %arg8[%c0_45, %c0_46, %c0_47] : memref<2x8x1xf32, #tpu.memory_space<vmem>>, vector<2x8x1xf32>
      %46 = vector.broadcast %45 : vector<2x8x1xf32> to vector<2x8x16xf32>
      %47 = arith.divf %44, %46 : vector<2x8x16xf32>
      %48 = arith.truncf %47 : vector<2x8x16xf32> to vector<2x8x16xbf16>
      %c0_48 = arith.constant 0 : index
      %c0_49 = arith.constant 0 : index
      %c0_50 = arith.constant 0 : index
      %c0_51 = arith.constant 0 : index
      %49 = vector.load %arg6[%c0_48, %c0_49, %c0_50, %c0_51] : memref<1x2x8x16xbf16, #tpu.memory_space<vmem>>, vector<1x2x8x16xbf16>
      %50 = vector.shape_cast %49 : vector<1x2x8x16xbf16> to vector<2x8x16xbf16>
      %51 = vector.shape_cast %48 : vector<2x8x16xbf16> to vector<1x2x8x16xbf16>
      tpu.vector_store %arg6[%c0_48, %c0_49, %c0_50, %c0_51], %51 {strides = array<i32>} : memref<1x2x8x16xbf16, #tpu.memory_space<vmem>>, vector<1x2x8x16xbf16>,
    } else {
    }
    return
  }
  func.func @transform_0(%arg0: i32, %arg1: i32) -> (i32, i32, i32, i32) {
    %c0_i32 = arith.constant 0 : i32
    %c0_i32_0 = arith.constant 0 : i32
    %c0_i32_1 = arith.constant 0 : i32
    %c0_i32_2 = arith.constant 0 : i32
    return %arg0, %c0_i32, %c0_i32_0, %c0_i32_1 : i32, i32, i32, i32
  }
  func.func @transform_1(%arg0: i32, %arg1: i32) -> (i32, i32, i32, i32) {
    %c0_i32 = arith.constant 0 : i32
    %c0_i32_0 = arith.constant 0 : i32
    %c0_i32_1 = arith.constant 0 : i32
    return %arg0, %c0_i32, %arg1, %c0_i32_0 : i32, i32, i32, i32
  }
  func.func @transform_2(%arg0: i32, %arg1: i32) -> (i32, i32, i32, i32) {
    %c0_i32 = arith.constant 0 : i32
    %c0_i32_0 = arith.constant 0 : i32
    %c0_i32_1 = arith.constant 0 : i32
    return %arg0, %c0_i32, %arg1, %c0_i32_0 : i32, i32, i32, i32
  }
  func.func @transform_3(%arg0: i32, %arg1: i32) -> (i32, i32, i32) {
    %c0_i32 = arith.constant 0 : i32
    %c0_i32_0 = arith.constant 0 : i32
    return %arg0, %c0_i32, %arg1 : i32, i32, i32
  }
  func.func @transform_4(%arg0: i32, %arg1: i32) -> (i32, i32, i32, i32) {
    %c0_i32 = arith.constant 0 : i32
    %c0_i32_0 = arith.constant 0 : i32
    %c0_i32_1 = arith.constant 0 : i32
    %c0_i32_2 = arith.constant 0 : i32
    return %arg0, %c0_i32, %c0_i32_0, %c0_i32_1 : i32, i32, i32, i32
  }
}

module attributes {stable_mosaic.version = 11 : i64} {
  func.func @_linear_add_ln_kernel(%arg0: i32, %arg1: memref<16x32xbf16, #tpu.memory_space<vmem>>, %arg2: memref<32x32xbf16, #tpu.memory_space<vmem>>, %arg3: memref<1x32xf32, #tpu.memory_space<vmem>>, %arg4: memref<16x32xbf16, #tpu.memory_space<vmem>>, %arg5: memref<1x32xf32, #tpu.memory_space<vmem>>, %arg6: memref<1x32xf32, #tpu.memory_space<vmem>>, %arg7: memref<16x32xbf16, #tpu.memory_space<vmem>>) attributes {dimension_semantics = [#tpu.dimension_semantics<parallel>], iteration_bounds = array<i64: 1>, scalar_prefetch = 0 : i64, scratch_operands = 0 : i64, tpu.core_type = #tpu.core_type<tc>, window_params = [{transform_indices = @transform_0, window_bounds = array<i64: 16, 32>}, {pipeline_mode = #tpu.pipeline_mode<synchronous>, transform_indices = @transform_1, window_bounds = array<i64: 32, 32>}, {pipeline_mode = #tpu.pipeline_mode<synchronous>, transform_indices = @transform_2, window_bounds = array<i64: 1, 32>}, {transform_indices = @transform_3, window_bounds = array<i64: 16, 32>}, {pipeline_mode = #tpu.pipeline_mode<synchronous>, transform_indices = @transform_4, window_bounds = array<i64: 1, 32>}, {pipeline_mode = #tpu.pipeline_mode<synchronous>, transform_indices = @transform_5, window_bounds = array<i64: 1, 32>}, {transform_indices = @transform_6, window_bounds = array<i64: 16, 32>}]} {
    %c0 = arith.constant 0 : index
    %c0_0 = arith.constant 0 : index
    %0 = vector.load %arg1[%c0, %c0_0] : memref<16x32xbf16, #tpu.memory_space<vmem>>, vector<16x32xbf16>
    %c0_1 = arith.constant 0 : index
    %c0_2 = arith.constant 0 : index
    %1 = vector.load %arg2[%c0_1, %c0_2] : memref<32x32xbf16, #tpu.memory_space<vmem>>, vector<32x32xbf16>
    %cst = arith.constant dense<0.000000e+00> : vector<16x32xf32>
    %2 = tpu.matmul %0, %1, %cst {dimension_numbers = #tpu.dot_dimension_numbers<[1], [0], [0], [1], [0, 0, 1, 1], [], []>} : vector<16x32xbf16>, vector<32x32xbf16>, vector<16x32xf32> -> vector<16x32xf32>
    %c0_3 = arith.constant 0 : index
    %c0_4 = arith.constant 0 : index
    %3 = vector.load %arg3[%c0_3, %c0_4] : memref<1x32xf32, #tpu.memory_space<vmem>>, vector<1x32xf32>
    %4 = vector.broadcast %3 : vector<1x32xf32> to vector<16x32xf32>
    %5 = arith.addf %2, %4 : vector<16x32xf32>
    %c0_5 = arith.constant 0 : index
    %c0_6 = arith.constant 0 : index
    %6 = vector.load %arg4[%c0_5, %c0_6] : memref<16x32xbf16, #tpu.memory_space<vmem>>, vector<16x32xbf16>
    %7 = arith.extf %6 : vector<16x32xbf16> to vector<16x32xf32>
    %8 = arith.addf %5, %7 : vector<16x32xf32>
    %cst_7 = arith.constant dense<0.000000e+00> : vector<16xf32>
    %9 = vector.multi_reduction <add>, %8, %cst_7 [1] : vector<16x32xf32> to vector<16xf32>
    %10 = vector.shape_cast %9 : vector<16xf32> to vector<16x1xf32>
    %cst_8 = arith.constant 3.200000e+01 : f32
    %11 = vector.broadcast %cst_8 : f32 to vector<16x1xf32>
    %12 = arith.divf %10, %11 : vector<16x1xf32>
    %13 = vector.broadcast %12 : vector<16x1xf32> to vector<16x32xf32>
    %14 = arith.subf %8, %13 : vector<16x32xf32>
    %15 = vector.broadcast %12 : vector<16x1xf32> to vector<16x32xf32>
    %16 = arith.subf %8, %15 : vector<16x32xf32>
    %17 = arith.mulf %14, %16 : vector<16x32xf32>
    %cst_9 = arith.constant dense<0.000000e+00> : vector<16xf32>
    %18 = vector.multi_reduction <add>, %17, %cst_9 [1] : vector<16x32xf32> to vector<16xf32>
    %19 = vector.shape_cast %18 : vector<16xf32> to vector<16x1xf32>
    %cst_10 = arith.constant 3.200000e+01 : f32
    %20 = vector.broadcast %cst_10 : f32 to vector<16x1xf32>
    %21 = arith.divf %19, %20 : vector<16x1xf32>
    %22 = vector.broadcast %12 : vector<16x1xf32> to vector<16x32xf32>
    %23 = arith.subf %8, %22 : vector<16x32xf32>
    %cst_11 = arith.constant 9.99999996E-13 : f32
    %24 = vector.broadcast %cst_11 : f32 to vector<16x1xf32>
    %25 = arith.addf %21, %24 : vector<16x1xf32>
    %26 = math.rsqrt %25 : vector<16x1xf32>
    %27 = vector.broadcast %26 : vector<16x1xf32> to vector<16x32xf32>
    %28 = arith.mulf %23, %27 : vector<16x32xf32>
    %c0_12 = arith.constant 0 : index
    %c0_13 = arith.constant 0 : index
    %29 = vector.load %arg5[%c0_12, %c0_13] : memref<1x32xf32, #tpu.memory_space<vmem>>, vector<1x32xf32>
    %30 = vector.broadcast %29 : vector<1x32xf32> to vector<16x32xf32>
    %31 = arith.mulf %28, %30 : vector<16x32xf32>
    %c0_14 = arith.constant 0 : index
    %c0_15 = arith.constant 0 : index
    %32 = vector.load %arg6[%c0_14, %c0_15] : memref<1x32xf32, #tpu.memory_space<vmem>>, vector<1x32xf32>
    %33 = vector.broadcast %32 : vector<1x32xf32> to vector<16x32xf32>
    %34 = arith.addf %31, %33 : vector<16x32xf32>
    %35 = arith.truncf %34 : vector<16x32xf32> to vector<16x32xbf16>
    %c0_16 = arith.constant 0 : index
    %c0_17 = arith.constant 0 : index
    %36 = vector.load %arg7[%c0_16, %c0_17] : memref<16x32xbf16, #tpu.memory_space<vmem>>, vector<16x32xbf16>
    tpu.vector_store %arg7[%c0_16, %c0_17], %35 {strides = array<i32>} : memref<16x32xbf16, #tpu.memory_space<vmem>>, vector<16x32xbf16>,
    return
  }
  func.func @transform_0(%arg0: i32) -> (i32, i32) {
    %c0_i32 = arith.constant 0 : i32
    %c0_i32_0 = arith.constant 0 : i32
    return %arg0, %c0_i32 : i32, i32
  }
  func.func @transform_1(%arg0: i32) -> (i32, i32) {
    %c0_i32 = arith.constant 0 : i32
    %c0_i32_0 = arith.constant 0 : i32
    %c0_i32_1 = arith.constant 0 : i32
    return %c0_i32, %c0_i32_0 : i32, i32
  }
  func.func @transform_2(%arg0: i32) -> (i32, i32) {
    %c0_i32 = arith.constant 0 : i32
    %c0_i32_0 = arith.constant 0 : i32
    %c0_i32_1 = arith.constant 0 : i32
    return %c0_i32, %c0_i32_0 : i32, i32
  }
  func.func @transform_3(%arg0: i32) -> (i32, i32) {
    %c0_i32 = arith.constant 0 : i32
    %c0_i32_0 = arith.constant 0 : i32
    return %arg0, %c0_i32 : i32, i32
  }
  func.func @transform_4(%arg0: i32) -> (i32, i32) {
    %c0_i32 = arith.constant 0 : i32
    %c0_i32_0 = arith.constant 0 : i32
    %c0_i32_1 = arith.constant 0 : i32
    return %c0_i32, %c0_i32_0 : i32, i32
  }
  func.func @transform_5(%arg0: i32) -> (i32, i32) {
    %c0_i32 = arith.constant 0 : i32
    %c0_i32_0 = arith.constant 0 : i32
    %c0_i32_1 = arith.constant 0 : i32
    return %c0_i32, %c0_i32_0 : i32, i32
  }
  func.func @transform_6(%arg0: i32) -> (i32, i32) {
    %c0_i32 = arith.constant 0 : i32
    %c0_i32_0 = arith.constant 0 : i32
    return %arg0, %c0_i32 : i32, i32
  }
}

module attributes {stable_mosaic.version = 11 : i64} {
  func.func @_linear_add_ln_kernel(%arg0: i32, %arg1: memref<16x64xbf16, #tpu.memory_space<vmem>>, %arg2: memref<64x32xbf16, #tpu.memory_space<vmem>>, %arg3: memref<1x32xf32, #tpu.memory_space<vmem>>, %arg4: memref<16x32xbf16, #tpu.memory_space<vmem>>, %arg5: memref<1x32xf32, #tpu.memory_space<vmem>>, %arg6: memref<1x32xf32, #tpu.memory_space<vmem>>, %arg7: memref<16x32xbf16, #tpu.memory_space<vmem>>) attributes {dimension_semantics = [#tpu.dimension_semantics<parallel>], iteration_bounds = array<i64: 1>, scalar_prefetch = 0 : i64, scratch_operands = 0 : i64, tpu.core_type = #tpu.core_type<tc>, window_params = [{transform_indices = @transform_0, window_bounds = array<i64: 16, 64>}, {pipeline_mode = #tpu.pipeline_mode<synchronous>, transform_indices = @transform_1, window_bounds = array<i64: 64, 32>}, {pipeline_mode = #tpu.pipeline_mode<synchronous>, transform_indices = @transform_2, window_bounds = array<i64: 1, 32>}, {transform_indices = @transform_3, window_bounds = array<i64: 16, 32>}, {pipeline_mode = #tpu.pipeline_mode<synchronous>, transform_indices = @transform_4, window_bounds = array<i64: 1, 32>}, {pipeline_mode = #tpu.pipeline_mode<synchronous>, transform_indices = @transform_5, window_bounds = array<i64: 1, 32>}, {transform_indices = @transform_6, window_bounds = array<i64: 16, 32>}]} {
    %c0 = arith.constant 0 : index
    %c0_0 = arith.constant 0 : index
    %0 = vector.load %arg1[%c0, %c0_0] : memref<16x64xbf16, #tpu.memory_space<vmem>>, vector<16x64xbf16>
    %c0_1 = arith.constant 0 : index
    %c0_2 = arith.constant 0 : index
    %1 = vector.load %arg2[%c0_1, %c0_2] : memref<64x32xbf16, #tpu.memory_space<vmem>>, vector<64x32xbf16>
    %cst = arith.constant dense<0.000000e+00> : vector<16x32xf32>
    %2 = tpu.matmul %0, %1, %cst {dimension_numbers = #tpu.dot_dimension_numbers<[1], [0], [0], [1], [0, 0, 1, 1], [], []>} : vector<16x64xbf16>, vector<64x32xbf16>, vector<16x32xf32> -> vector<16x32xf32>
    %c0_3 = arith.constant 0 : index
    %c0_4 = arith.constant 0 : index
    %3 = vector.load %arg3[%c0_3, %c0_4] : memref<1x32xf32, #tpu.memory_space<vmem>>, vector<1x32xf32>
    %4 = vector.broadcast %3 : vector<1x32xf32> to vector<16x32xf32>
    %5 = arith.addf %2, %4 : vector<16x32xf32>
    %c0_5 = arith.constant 0 : index
    %c0_6 = arith.constant 0 : index
    %6 = vector.load %arg4[%c0_5, %c0_6] : memref<16x32xbf16, #tpu.memory_space<vmem>>, vector<16x32xbf16>
    %7 = arith.extf %6 : vector<16x32xbf16> to vector<16x32xf32>
    %8 = arith.addf %5, %7 : vector<16x32xf32>
    %cst_7 = arith.constant dense<0.000000e+00> : vector<16xf32>
    %9 = vector.multi_reduction <add>, %8, %cst_7 [1] : vector<16x32xf32> to vector<16xf32>
    %10 = vector.shape_cast %9 : vector<16xf32> to vector<16x1xf32>
    %cst_8 = arith.constant 3.200000e+01 : f32
    %11 = vector.broadcast %cst_8 : f32 to vector<16x1xf32>
    %12 = arith.divf %10, %11 : vector<16x1xf32>
    %13 = vector.broadcast %12 : vector<16x1xf32> to vector<16x32xf32>
    %14 = arith.subf %8, %13 : vector<16x32xf32>
    %15 = vector.broadcast %12 : vector<16x1xf32> to vector<16x32xf32>
    %16 = arith.subf %8, %15 : vector<16x32xf32>
    %17 = arith.mulf %14, %16 : vector<16x32xf32>
    %cst_9 = arith.constant dense<0.000000e+00> : vector<16xf32>
    %18 = vector.multi_reduction <add>, %17, %cst_9 [1] : vector<16x32xf32> to vector<16xf32>
    %19 = vector.shape_cast %18 : vector<16xf32> to vector<16x1xf32>
    %cst_10 = arith.constant 3.200000e+01 : f32
    %20 = vector.broadcast %cst_10 : f32 to vector<16x1xf32>
    %21 = arith.divf %19, %20 : vector<16x1xf32>
    %22 = vector.broadcast %12 : vector<16x1xf32> to vector<16x32xf32>
    %23 = arith.subf %8, %22 : vector<16x32xf32>
    %cst_11 = arith.constant 9.99999996E-13 : f32
    %24 = vector.broadcast %cst_11 : f32 to vector<16x1xf32>
    %25 = arith.addf %21, %24 : vector<16x1xf32>
    %26 = math.rsqrt %25 : vector<16x1xf32>
    %27 = vector.broadcast %26 : vector<16x1xf32> to vector<16x32xf32>
    %28 = arith.mulf %23, %27 : vector<16x32xf32>
    %c0_12 = arith.constant 0 : index
    %c0_13 = arith.constant 0 : index
    %29 = vector.load %arg5[%c0_12, %c0_13] : memref<1x32xf32, #tpu.memory_space<vmem>>, vector<1x32xf32>
    %30 = vector.broadcast %29 : vector<1x32xf32> to vector<16x32xf32>
    %31 = arith.mulf %28, %30 : vector<16x32xf32>
    %c0_14 = arith.constant 0 : index
    %c0_15 = arith.constant 0 : index
    %32 = vector.load %arg6[%c0_14, %c0_15] : memref<1x32xf32, #tpu.memory_space<vmem>>, vector<1x32xf32>
    %33 = vector.broadcast %32 : vector<1x32xf32> to vector<16x32xf32>
    %34 = arith.addf %31, %33 : vector<16x32xf32>
    %35 = arith.truncf %34 : vector<16x32xf32> to vector<16x32xbf16>
    %c0_16 = arith.constant 0 : index
    %c0_17 = arith.constant 0 : index
    %36 = vector.load %arg7[%c0_16, %c0_17] : memref<16x32xbf16, #tpu.memory_space<vmem>>, vector<16x32xbf16>
    tpu.vector_store %arg7[%c0_16, %c0_17], %35 {strides = array<i32>} : memref<16x32xbf16, #tpu.memory_space<vmem>>, vector<16x32xbf16>,
    return
  }
  func.func @transform_0(%arg0: i32) -> (i32, i32) {
    %c0_i32 = arith.constant 0 : i32
    %c0_i32_0 = arith.constant 0 : i32
    return %arg0, %c0_i32 : i32, i32
  }
  func.func @transform_1(%arg0: i32) -> (i32, i32) {
    %c0_i32 = arith.constant 0 : i32
    %c0_i32_0 = arith.constant 0 : i32
    %c0_i32_1 = arith.constant 0 : i32
    return %c0_i32, %c0_i32_0 : i32, i32
  }
  func.func @transform_2(%arg0: i32) -> (i32, i32) {
    %c0_i32 = arith.constant 0 : i32
    %c0_i32_0 = arith.constant 0 : i32
    %c0_i32_1 = arith.constant 0 : i32
    return %c0_i32, %c0_i32_0 : i32, i32
  }
  func.func @transform_3(%arg0: i32) -> (i32, i32) {
    %c0_i32 = arith.constant 0 : i32
    %c0_i32_0 = arith.constant 0 : i32
    return %arg0, %c0_i32 : i32, i32
  }
  func.func @transform_4(%arg0: i32) -> (i32, i32) {
    %c0_i32 = arith.constant 0 : i32
    %c0_i32_0 = arith.constant 0 : i32
    %c0_i32_1 = arith.constant 0 : i32
    return %c0_i32, %c0_i32_0 : i32, i32
  }
  func.func @transform_5(%arg0: i32) -> (i32, i32) {
    %c0_i32 = arith.constant 0 : i32
    %c0_i32_0 = arith.constant 0 : i32
    %c0_i32_1 = arith.constant 0 : i32
    return %c0_i32, %c0_i32_0 : i32, i32
  }
  func.func @transform_6(%arg0: i32) -> (i32, i32) {
    %c0_i32 = arith.constant 0 : i32
    %c0_i32_0 = arith.constant 0 : i32
    return %arg0, %c0_i32 : i32, i32
  }
}

module attributes {stable_mosaic.version = 11 : i64} {
  func.func @_linear_kernel(%arg0: i32, %arg1: i32, %arg2: memref<16x32xbf16, #tpu.memory_space<vmem>>, %arg3: memref<32x64xbf16, #tpu.memory_space<vmem>>, %arg4: memref<1x64xf32, #tpu.memory_space<vmem>>, %arg5: memref<16x64xbf16, #tpu.memory_space<vmem>>) attributes {dimension_semantics = [#tpu.dimension_semantics<parallel>, #tpu.dimension_semantics<parallel>], iteration_bounds = array<i64: 1, 1>, scalar_prefetch = 0 : i64, scratch_operands = 0 : i64, tpu.core_type = #tpu.core_type<tc>, window_params = [{transform_indices = @transform_0, window_bounds = array<i64: 16, 32>}, {transform_indices = @transform_1, window_bounds = array<i64: 32, 64>}, {transform_indices = @transform_2, window_bounds = array<i64: 1, 64>}, {transform_indices = @transform_3, window_bounds = array<i64: 16, 64>}]} {
    %c0 = arith.constant 0 : index
    %c0_0 = arith.constant 0 : index
    %0 = vector.load %arg2[%c0, %c0_0] : memref<16x32xbf16, #tpu.memory_space<vmem>>, vector<16x32xbf16>
    %c0_1 = arith.constant 0 : index
    %c0_2 = arith.constant 0 : index
    %1 = vector.load %arg3[%c0_1, %c0_2] : memref<32x64xbf16, #tpu.memory_space<vmem>>, vector<32x64xbf16>
    %cst = arith.constant dense<0.000000e+00> : vector<16x64xf32>
    %2 = tpu.matmul %0, %1, %cst {dimension_numbers = #tpu.dot_dimension_numbers<[1], [0], [0], [1], [0, 0, 1, 1], [], []>} : vector<16x32xbf16>, vector<32x64xbf16>, vector<16x64xf32> -> vector<16x64xf32>
    %c0_3 = arith.constant 0 : index
    %c0_4 = arith.constant 0 : index
    %3 = vector.load %arg4[%c0_3, %c0_4] : memref<1x64xf32, #tpu.memory_space<vmem>>, vector<1x64xf32>
    %4 = vector.broadcast %3 : vector<1x64xf32> to vector<16x64xf32>
    %5 = arith.addf %2, %4 : vector<16x64xf32>
    %cst_5 = arith.constant 5.000000e-01 : f32
    %6 = vector.broadcast %cst_5 : f32 to vector<16x64xf32>
    %7 = arith.mulf %6, %5 : vector<16x64xf32>
    %cst_6 = arith.constant 4.471500e-02 : f32
    %8 = vector.broadcast %cst_6 : f32 to vector<16x64xf32>
    %9 = arith.mulf %8, %5 : vector<16x64xf32>
    %10 = arith.mulf %9, %5 : vector<16x64xf32>
    %11 = arith.mulf %10, %5 : vector<16x64xf32>
    %12 = arith.addf %5, %11 : vector<16x64xf32>
    %cst_7 = arith.constant 0.797884583 : f32
    %13 = vector.broadcast %cst_7 : f32 to vector<16x64xf32>
    %14 = arith.mulf %13, %12 : vector<16x64xf32>
    %15 = math.tanh %14 : vector<16x64xf32>
    %cst_8 = arith.constant 1.000000e+00 : f32
    %16 = vector.broadcast %cst_8 : f32 to vector<16x64xf32>
    %17 = arith.addf %16, %15 : vector<16x64xf32>
    %18 = arith.mulf %7, %17 : vector<16x64xf32>
    %19 = arith.truncf %18 : vector<16x64xf32> to vector<16x64xbf16>
    %c0_9 = arith.constant 0 : index
    %c0_10 = arith.constant 0 : index
    %20 = vector.load %arg5[%c0_9, %c0_10] : memref<16x64xbf16, #tpu.memory_space<vmem>>, vector<16x64xbf16>
    tpu.vector_store %arg5[%c0_9, %c0_10], %19 {strides = array<i32>} : memref<16x64xbf16, #tpu.memory_space<vmem>>, vector<16x64xbf16>,
    return
  }
  func.func @transform_0(%arg0: i32, %arg1: i32) -> (i32, i32) {
    %c0_i32 = arith.constant 0 : i32
    %c0_i32_0 = arith.constant 0 : i32
    return %arg1, %c0_i32 : i32, i32
  }
  func.func @transform_1(%arg0: i32, %arg1: i32) -> (i32, i32) {
    %c0_i32 = arith.constant 0 : i32
    %c0_i32_0 = arith.constant 0 : i32
    return %c0_i32, %arg0 : i32, i32
  }
  func.func @transform_2(%arg0: i32, %arg1: i32) -> (i32, i32) {
    %c0_i32 = arith.constant 0 : i32
    %c0_i32_0 = arith.constant 0 : i32
    return %c0_i32, %arg0 : i32, i32
  }
  func.func @transform_3(%arg0: i32, %arg1: i32) -> (i32, i32) {
    %c0_i32 = arith.constant 0 : i32
    return %arg1, %arg0 : i32, i32
  }
}

module attributes {stable_mosaic.version = 11 : i64} {
  func.func @_linear_kernel(%arg0: i32, %arg1: i32, %arg2: memref<2x32xbf16, #tpu.memory_space<vmem>>, %arg3: memref<32x32xbf16, #tpu.memory_space<vmem>>, %arg4: memref<1x32xf32, #tpu.memory_space<vmem>>, %arg5: memref<2x32xbf16, #tpu.memory_space<vmem>>) attributes {dimension_semantics = [#tpu.dimension_semantics<parallel>, #tpu.dimension_semantics<parallel>], iteration_bounds = array<i64: 1, 1>, scalar_prefetch = 0 : i64, scratch_operands = 0 : i64, tpu.core_type = #tpu.core_type<tc>, window_params = [{transform_indices = @transform_0, window_bounds = array<i64: 2, 32>}, {transform_indices = @transform_1, window_bounds = array<i64: 32, 32>}, {transform_indices = @transform_2, window_bounds = array<i64: 1, 32>}, {transform_indices = @transform_3, window_bounds = array<i64: 2, 32>}]} {
    %c0 = arith.constant 0 : index
    %c0_0 = arith.constant 0 : index
    %0 = vector.load %arg2[%c0, %c0_0] : memref<2x32xbf16, #tpu.memory_space<vmem>>, vector<2x32xbf16>
    %c0_1 = arith.constant 0 : index
    %c0_2 = arith.constant 0 : index
    %1 = vector.load %arg3[%c0_1, %c0_2] : memref<32x32xbf16, #tpu.memory_space<vmem>>, vector<32x32xbf16>
    %cst = arith.constant dense<0.000000e+00> : vector<2x32xf32>
    %2 = tpu.matmul %0, %1, %cst {dimension_numbers = #tpu.dot_dimension_numbers<[1], [0], [0], [1], [0, 0, 1, 1], [], []>} : vector<2x32xbf16>, vector<32x32xbf16>, vector<2x32xf32> -> vector<2x32xf32>
    %c0_3 = arith.constant 0 : index
    %c0_4 = arith.constant 0 : index
    %3 = vector.load %arg4[%c0_3, %c0_4] : memref<1x32xf32, #tpu.memory_space<vmem>>, vector<1x32xf32>
    %4 = vector.broadcast %3 : vector<1x32xf32> to vector<2x32xf32>
    %5 = arith.addf %2, %4 : vector<2x32xf32>
    %6 = math.tanh %5 : vector<2x32xf32>
    %7 = arith.truncf %6 : vector<2x32xf32> to vector<2x32xbf16>
    %c0_5 = arith.constant 0 : index
    %c0_6 = arith.constant 0 : index
    %8 = vector.load %arg5[%c0_5, %c0_6] : memref<2x32xbf16, #tpu.memory_space<vmem>>, vector<2x32xbf16>
    tpu.vector_store %arg5[%c0_5, %c0_6], %7 {strides = array<i32>} : memref<2x32xbf16, #tpu.memory_space<vmem>>, vector<2x32xbf16>,
    return
  }
  func.func @transform_0(%arg0: i32, %arg1: i32) -> (i32, i32) {
    %c0_i32 = arith.constant 0 : i32
    %c0_i32_0 = arith.constant 0 : i32
    return %arg1, %c0_i32 : i32, i32
  }
  func.func @transform_1(%arg0: i32, %arg1: i32) -> (i32, i32) {
    %c0_i32 = arith.constant 0 : i32
    %c0_i32_0 = arith.constant 0 : i32
    return %c0_i32, %arg0 : i32, i32
  }
  func.func @transform_2(%arg0: i32, %arg1: i32) -> (i32, i32) {
    %c0_i32 = arith.constant 0 : i32
    %c0_i32_0 = arith.constant 0 : i32
    return %c0_i32, %arg0 : i32, i32
  }
  func.func @transform_3(%arg0: i32, %arg1: i32) -> (i32, i32) {
    %c0_i32 = arith.constant 0 : i32
    return %arg1, %arg0 : i32, i32
  }
}

module attributes {stable_mosaic.version = 11 : i64} {
  func.func @_linear_kernel(%arg0: i32, %arg1: i32, %arg2: memref<2x32xbf16, #tpu.memory_space<vmem>>, %arg3: memref<32x128xbf16, #tpu.memory_space<vmem>>, %arg4: memref<1x128xf32, #tpu.memory_space<vmem>>, %arg5: memref<2x128xf32, #tpu.memory_space<vmem>>) attributes {dimension_semantics = [#tpu.dimension_semantics<parallel>, #tpu.dimension_semantics<parallel>], iteration_bounds = array<i64: 1, 1>, scalar_prefetch = 0 : i64, scratch_operands = 0 : i64, tpu.core_type = #tpu.core_type<tc>, window_params = [{transform_indices = @transform_0, window_bounds = array<i64: 2, 32>}, {transform_indices = @transform_1, window_bounds = array<i64: 32, 128>}, {transform_indices = @transform_2, window_bounds = array<i64: 1, 128>}, {transform_indices = @transform_3, window_bounds = array<i64: 2, 128>}]} {
    %c0 = arith.constant 0 : index
    %c0_0 = arith.constant 0 : index
    %0 = vector.load %arg2[%c0, %c0_0] : memref<2x32xbf16, #tpu.memory_space<vmem>>, vector<2x32xbf16>
    %c0_1 = arith.constant 0 : index
    %c0_2 = arith.constant 0 : index
    %1 = vector.load %arg3[%c0_1, %c0_2] : memref<32x128xbf16, #tpu.memory_space<vmem>>, vector<32x128xbf16>
    %cst = arith.constant dense<0.000000e+00> : vector<2x128xf32>
    %2 = tpu.matmul %0, %1, %cst {dimension_numbers = #tpu.dot_dimension_numbers<[1], [0], [0], [1], [0, 0, 1, 1], [], []>} : vector<2x32xbf16>, vector<32x128xbf16>, vector<2x128xf32> -> vector<2x128xf32>
    %c0_3 = arith.constant 0 : index
    %c0_4 = arith.constant 0 : index
    %3 = vector.load %arg4[%c0_3, %c0_4] : memref<1x128xf32, #tpu.memory_space<vmem>>, vector<1x128xf32>
    %4 = vector.broadcast %3 : vector<1x128xf32> to vector<2x128xf32>
    %5 = arith.addf %2, %4 : vector<2x128xf32>
    %c0_5 = arith.constant 0 : index
    %c0_6 = arith.constant 0 : index
    %6 = vector.load %arg5[%c0_5, %c0_6] : memref<2x128xf32, #tpu.memory_space<vmem>>, vector<2x128xf32>
    tpu.vector_store %arg5[%c0_5, %c0_6], %5 {strides = array<i32>} : memref<2x128xf32, #tpu.memory_space<vmem>>, vector<2x128xf32>,
    return
  }
  func.func @transform_0(%arg0: i32, %arg1: i32) -> (i32, i32) {
    %c0_i32 = arith.constant 0 : i32
    %c0_i32_0 = arith.constant 0 : i32
    return %arg1, %c0_i32 : i32, i32
  }
  func.func @transform_1(%arg0: i32, %arg1: i32) -> (i32, i32) {
    %c0_i32 = arith.constant 0 : i32
    %c0_i32_0 = arith.constant 0 : i32
    return %c0_i32, %arg0 : i32, i32
  }
  func.func @transform_2(%arg0: i32, %arg1: i32) -> (i32, i32) {
    %c0_i32 = arith.constant 0 : i32
    %c0_i32_0 = arith.constant 0 : i32
    return %c0_i32, %arg0 : i32, i32
  }
  func.func @transform_3(%arg0: i32, %arg1: i32) -> (i32, i32) {
    %c0_i32 = arith.constant 0 : i32
    return %arg1, %arg0 : i32, i32
  }
}

</mosaic_0001>

<llo_original>
// kernel: bert_classifier_forward.13
$region0: #{bert_classifier_forward.13}
  #allocation0 [shape = 'u32[]', space=smem, size = 0x4, offset = 0x4, fixed_abs, tag = 'smem constant byte address 0x4 - core index']
  #allocation1 [shape = 'u32[144,128]{1,0:T(1,128)}', space=vmem, size = 0x12000, scoped, tag = 'internal scratch']
  %s0 = inlined_call_operand.vmem [shape: f32[16,32], index: 0, kind: input, shape index: {}]
  %s1 = inlined_call_operand.vmem [shape: f32[1,32], index: 1, kind: input, shape index: {}]
  %s2 = inlined_call_operand.vmem [shape: f32[1,32], index: 2, kind: input, shape index: {}]
  %s3 = inlined_call_operand.vmem [shape: bf16[16,32], index: 3, kind: output, shape index: {}]
  %s4 = sld [smem:[#allocation0]]
  $region22: #{bert_classifier_forward.13} parent=0
    _
  %s6 = ssub.s32 1, %s4
  %s7 = scalar_select 0, %s6, %s4
  // Predicated region
  $region2: #{bert_classifier_forward.13} parent=0 // pred_check
    _
  $region3: #{bert_classifier_forward.13} parent=0 // pred_check_branch
    %9 = sbr.rel (0) target = $region5
  $region4: #{bert_classifier_forward.13} parent=0 // pred_region
    _
  $region5: #{bert_classifier_forward.13} parent=0 // pred_fallthru
    _
  // Predicated region
  $region6: #{bert_classifier_forward.13} parent=0 // pred_check
    _
  $region7: #{bert_classifier_forward.13} parent=0 // pred_check_branch
    %11 = sbr.rel (0) target = $region9
  $region8: #{bert_classifier_forward.13} parent=0 // pred_region
    _
  $region9: #{bert_classifier_forward.13} parent=0 // pred_fallthru
    _
  // Predicated region
  $region10: #{bert_classifier_forward.13} parent=0 // pred_check
    _
  $region11: #{bert_classifier_forward.13} parent=0 // pred_check_branch
    %13 = sbr.rel (0) target = $region13
  $region12: #{bert_classifier_forward.13} parent=0 // pred_region
    _
  $region13: #{bert_classifier_forward.13} parent=0 // pred_fallthru
    _
  %v14 = vld [vmem:[%s0] sm:$0xff]
  %v15 = vld [vmem:[%s0 + $0x8] sm:$0xff]
  %vm16 = vcmask 261120
  %v17 = vsel %vm16, %v14, 0.0
  %18 = vadd.xlane.f32.xlu0 %v17
  %v19 = vpop.xlane.xlu0 %18
  %v20 = vsel %vm16, %v15, 0.0
  %21 = vadd.xlane.f32.xlu0 %v20
  %v22 = vpop.xlane.xlu0 %21
  %v23 = vrcp.pop 32.0
  %v24 = vmul.f32 %v19, %v23
  %v25 = vmul.f32 %v22, %v23
  %v26 = vsub.f32 %v14, %v24
  %v27 = vsub.f32 %v15, %v25
  %v28 = vmul.f32 %v26, %v26
  %v29 = vmul.f32 %v27, %v27
  %v30 = vsel %vm16, %v28, 0.0
  %31 = vadd.xlane.f32.xlu0 %v30
  %v32 = vpop.xlane.xlu0 %31
  %v33 = vsel %vm16, %v29, 0.0
  %34 = vadd.xlane.f32.xlu0 %v33
  %v35 = vpop.xlane.xlu0 %34
  %v36 = vmul.f32 %v32, %v23
  %v37 = vmul.f32 %v35, %v23
  %v38 = vadd.f32 %v36, 1e-12
  %v39 = vadd.f32 %v37, 1e-12
  %v40 = vrsqrt.pop %v38
  %v41 = vrsqrt.pop %v39
  %v42 = vmul.f32 %v26, %v40
  %v43 = vmul.f32 %v27, %v41
  %v44 = vld [vmem:[%s1] sm:$0x1]
  %v46 = vlaneseq
  %v47 = vshrl.u32 %v46, 7
  %v48 = vsub.s32 0, %v47
  %v49 = vrot.slane %v44, %v48
  %v51 = vmul.f32 %v42, %v49
  %v52 = vmul.f32 %v43, %v49
  %v53 = vld [vmem:[%s2] sm:$0x1]
  %v55 = vlaneseq
  %v56 = vshrl.u32 %v55, 7
  %v57 = vsub.s32 0, %v56
  %v58 = vrot.slane %v53, %v57
  %v60 = vadd.f32 %v51, %v58
  %v61 = vadd.f32 %v52, %v58
  %v62 = vpack.c.bf16 %v61, %v60
  %v64 = vunpack.c.l.b16 %v62
  %v65 = vunpack.c.h.b16 %v62
  %v66 = vpack.c.b16 %v64, %v64
  %v67 = vpack.c.b16 %v65, %v65
  %vm70 = vcmask 257024
  %71 = vst.msk [vmem:[%s3] sm:$0xf] %vm70, %v66
  %72 = vst.msk [vmem:[%s3 + $0x4] sm:$0xf] %vm70, %v67
  // Predicated region
  $region14: #{bert_classifier_forward.13} parent=0 // pred_check
    _
  $region15: #{bert_classifier_forward.13} parent=0 // pred_check_branch
    %74 = sbr.rel (0) target = $region17
  $region16: #{bert_classifier_forward.13} parent=0 // pred_region
    _
  $region17: #{bert_classifier_forward.13} parent=0 // pred_fallthru
    _
  // Predicated region
  $region18: #{bert_classifier_forward.13} parent=0 // pred_check
    _
  $region19: #{bert_classifier_forward.13} parent=0 // pred_check_branch
    %76 = sbr.rel (0) target = $region21
  $region20: #{bert_classifier_forward.13} parent=0 // pred_region
    _
  $region21: #{bert_classifier_forward.13} parent=0 // pred_fallthru
    _

// kernel: bert_classifier_forward.14
$region0: #{bert_classifier_forward.14}
  #allocation0 [shape = 'u32[]', space=smem, size = 0x4, offset = 0x4, fixed_abs, tag = 'smem constant byte address 0x4 - core index']
  #allocation1 [shape = 'u32[144,128]{1,0:T(1,128)}', space=vmem, size = 0x12000, scoped, tag = 'internal scratch']
  %s0 = inlined_call_operand.vmem [shape: bf16[16,32], index: 0, kind: input, shape index: {}]
  %s1 = inlined_call_operand.vmem [shape: bf16[32,96], index: 1, kind: input, shape index: {}]
  %s2 = inlined_call_operand.vmem [shape: f32[1,96], index: 2, kind: input, shape index: {}]
  %s3 = inlined_call_operand.vmem [shape: bf16[16,96], index: 3, kind: output, shape index: {}]
  %s4 = sld [smem:[#allocation0]]
  $region22: #{bert_classifier_forward.14} parent=0
    _
  %s6 = ssub.s32 1, %s4
  %s7 = scalar_select 0, %s6, %s4
  // Predicated region
  $region2: #{bert_classifier_forward.14} parent=0 // pred_check
    _
  $region3: #{bert_classifier_forward.14} parent=0 // pred_check_branch
    %9 = sbr.rel (0) target = $region5
  $region4: #{bert_classifier_forward.14} parent=0 // pred_region
    _
  $region5: #{bert_classifier_forward.14} parent=0 // pred_fallthru
    _
  // Predicated region
  $region6: #{bert_classifier_forward.14} parent=0 // pred_check
    _
  $region7: #{bert_classifier_forward.14} parent=0 // pred_check_branch
    %11 = sbr.rel (0) target = $region9
  $region8: #{bert_classifier_forward.14} parent=0 // pred_region
    _
  $region9: #{bert_classifier_forward.14} parent=0 // pred_fallthru
    _
  // Predicated region
  $region10: #{bert_classifier_forward.14} parent=0 // pred_check
    _
  $region11: #{bert_classifier_forward.14} parent=0 // pred_check_branch
    %13 = sbr.rel (0) target = $region13
  $region12: #{bert_classifier_forward.14} parent=0 // pred_region
    _
  $region13: #{bert_classifier_forward.14} parent=0 // pred_fallthru
    _
  %v15 = vld [vmem:[%s0] sm:$0xf]
  %v16 = vld [vmem:[%s0 + $0x4] sm:$0xf]
  %v17 = vld [vmem:[%s1] sm:$0xf]
  %v18 = vld [vmem:[%s1 + $0x4] sm:$0xf]
  %v19 = vld [vmem:[%s1 + $0x8] sm:$0xf]
  %v20 = vld [vmem:[%s1 + $0xc] sm:$0xf]
  %v21 = vld [vmem:[%s2] sm:$0x1]
  %v23 = vlaneseq
  %v24 = vshrl.u32 %v23, 7
  %v25 = vsub.s32 0, %v24
  %v26 = vrot.slane %v21, %v25
  %v30 = vunpack.c.l.b16 %v15
  %v31 = vunpack.c.l.b16 %v16
  %v32 = vpack.c.b16 %v31, %v30
  %v37 = vunpack.c.l.b16 %v17
  %v38 = vunpack.c.l.b16 %v18
  %v39 = vunpack.c.l.b16 %v19
  %v40 = vunpack.c.l.b16 %v20
  %v41 = vpack.c.b16 %v38, %v37
  %v42 = vpack.c.b16 %v40, %v39
  %vm45 = vcmask 261120
  %v47 = vsel %vm45, %v32, 0
  %49 = vmatprep.subr.bf16.mxu0 0
  %50 = vmatpush1.bf16.msra.mxu0 %v41
  %51 = vmatprep.subr.bf16.mxu0 0
  %52 = vmatpush1.bf16.msra.mxu0 %v42
  %53 = vmatprep.subr.bf16.mxu0 0
  %54 = vmatpush1.bf16.msra.mxu0 0
  %55 = vmatprep.subr.bf16.mxu0 0
  %56 = vmatpush1.bf16.msra.mxu0 0
  %57 = vmatprep.subr.bf16.mxu0 0
  %58 = vmatpush1.bf16.msra.mxu0 0
  %59 = vmatprep.subr.bf16.mxu0 0
  %60 = vmatpush1.bf16.msra.mxu0 0
  %61 = vmatprep.subr.bf16.mxu0 0
  %62 = vmatpush1.bf16.msra.mxu0 0
  %63 = vmatprep.subr.bf16.mxu0 0
  %64 = vmatpush1.bf16.msra.mxu0 0
  %65 = vmatprep.subr.bf16.mxu0 0
  %66 = vmatpush1.bf16.msra.mxu0 0
  %67 = vmatprep.subr.bf16.mxu0 0
  %68 = vmatpush1.bf16.msra.mxu0 0
  %69 = vmatprep.subr.bf16.mxu0 0
  %70 = vmatpush1.bf16.msra.mxu0 0
  %71 = vmatprep.subr.bf16.mxu0 0
  %72 = vmatpush1.bf16.msra.mxu0 0
  %73 = vmatprep.subr.bf16.mxu0 0
  %74 = vmatpush1.bf16.msra.mxu0 0
  %75 = vmatprep.subr.bf16.mxu0 0
  %76 = vmatpush1.bf16.msra.mxu0 0
  %77 = vmatprep.subr.bf16.mxu0 0
  %78 = vmatpush1.bf16.msra.mxu0 0
  %79 = vmatprep.subr.bf16.mxu0 0
  %80 = vmatpush1.bf16.msra.mxu0 0
  %81 = vmatprep.mubr.bf16.mxu0 0
  %82 = vmatmul.mubr.bf16.gmra.mrb[0].mxu0 %v47
  %v83 = vpop.f32.mrb[0].mxu0
  %v84 = vadd.f32 %v26, %v83
  %v85 = vpop.f32.mrb[0].mxu0
  %v86 = vpop.f32.mrb[0].mxu0
  %v87 = vadd.f32 %v26, %v86
  %v88 = vpop.f32.mrb[0].mxu0
  %89 = vdwg.mxu0
  %v90 = vpack.c.bf16 %v87, %v84
  %v92 = vunpack.c.l.b16 %v90
  %v93 = vunpack.c.h.b16 %v90
  %v94 = vpack.c.b16 %v92, %v92
  %v95 = vpack.c.b16 %v93, %v93
  %vm98 = vcmask 781312
  %99 = vst.msk [vmem:[%s3] sm:$0xf] %vm98, %v94
  %100 = vst.msk [vmem:[%s3 + $0x4] sm:$0xf] %vm98, %v95
  // Predicated region
  $region14: #{bert_classifier_forward.14} parent=0 // pred_check
    _
  $region15: #{bert_classifier_forward.14} parent=0 // pred_check_branch
    %102 = sbr.rel (0) target = $region17
  $region16: #{bert_classifier_forward.14} parent=0 // pred_region
    _
  $region17: #{bert_classifier_forward.14} parent=0 // pred_fallthru
    _
  // Predicated region
  $region18: #{bert_classifier_forward.14} parent=0 // pred_check
    _
  $region19: #{bert_classifier_forward.14} parent=0 // pred_check_branch
    %104 = sbr.rel (0) target = $region21
  $region20: #{bert_classifier_forward.14} parent=0 // pred_region
    _
  $region21: #{bert_classifier_forward.14} parent=0 // pred_fallthru
    _

// kernel: bert_classifier_forward.16
$region0: #{bert_classifier_forward.16}
  #allocation0 [shape = 'u32[]', space=smem, size = 0x4, offset = 0x4, fixed_abs, tag = 'smem constant byte address 0x4 - core index']
  #allocation1 [shape = 'u32[144,128]{1,0:T(1,128)}', space=vmem, size = 0x12000, scoped, tag = 'internal scratch']
  %s0 = inlined_call_operand.vmem [shape: bf16[16,32], index: 0, kind: input, shape index: {}]
  %s1 = inlined_call_operand.vmem [shape: bf16[32,32], index: 1, kind: input, shape index: {}]
  %s2 = inlined_call_operand.vmem [shape: f32[1,32], index: 2, kind: input, shape index: {}]
  %s3 = inlined_call_operand.vmem [shape: bf16[16,32], index: 3, kind: input, shape index: {}]
  %s4 = inlined_call_operand.vmem [shape: f32[1,32], index: 4, kind: input, shape index: {}]
  %s5 = inlined_call_operand.vmem [shape: f32[1,32], index: 5, kind: input, shape index: {}]
  %s6 = inlined_call_operand.vmem [shape: bf16[16,32], index: 6, kind: output, shape index: {}]
  %s7 = sld [smem:[#allocation0]]
  $region34: #{bert_classifier_forward.16} parent=0
    _
  %s9 = ssub.s32 1, %s7
  %s10 = scalar_select 0, %s9, %s7
  // Predicated region
  $region2: #{bert_classifier_forward.16} parent=0 // pred_check
    _
  $region3: #{bert_classifier_forward.16} parent=0 // pred_check_branch
    %12 = sbr.rel (0) target = $region5
  $region4: #{bert_classifier_forward.16} parent=0 // pred_region
    _
  $region5: #{bert_classifier_forward.16} parent=0 // pred_fallthru
    _
  // Predicated region
  $region6: #{bert_classifier_forward.16} parent=0 // pred_check
    _
  $region7: #{bert_classifier_forward.16} parent=0 // pred_check_branch
    %14 = sbr.rel (0) target = $region9
  $region8: #{bert_classifier_forward.16} parent=0 // pred_region
    _
  $region9: #{bert_classifier_forward.16} parent=0 // pred_fallthru
    _
  // Predicated region
  $region10: #{bert_classifier_forward.16} parent=0 // pred_check
    _
  $region11: #{bert_classifier_forward.16} parent=0 // pred_check_branch
    %16 = sbr.rel (0) target = $region13
  $region12: #{bert_classifier_forward.16} parent=0 // pred_region
    _
  $region13: #{bert_classifier_forward.16} parent=0 // pred_fallthru
    _
  // Predicated region
  $region14: #{bert_classifier_forward.16} parent=0 // pred_check
    _
  $region15: #{bert_classifier_forward.16} parent=0 // pred_check_branch
    %18 = sbr.rel (0) target = $region17
  $region16: #{bert_classifier_forward.16} parent=0 // pred_region
    _
  $region17: #{bert_classifier_forward.16} parent=0 // pred_fallthru
    _
  // Predicated region
  $region18: #{bert_classifier_forward.16} parent=0 // pred_check
    _
  $region19: #{bert_classifier_forward.16} parent=0 // pred_check_branch
    %20 = sbr.rel (0) target = $region21
  $region20: #{bert_classifier_forward.16} parent=0 // pred_region
    _
  $region21: #{bert_classifier_forward.16} parent=0 // pred_fallthru
    _
  // Predicated region
  $region22: #{bert_classifier_forward.16} parent=0 // pred_check
    _
  $region23: #{bert_classifier_forward.16} parent=0 // pred_check_branch
    %22 = sbr.rel (0) target = $region25
  $region24: #{bert_classifier_forward.16} parent=0 // pred_region
    _
  $region25: #{bert_classifier_forward.16} parent=0 // pred_fallthru
    _
  %v24 = vld [vmem:[%s0] sm:$0xf]
  %v25 = vld [vmem:[%s0 + $0x4] sm:$0xf]
  %v26 = vld [vmem:[%s1] sm:$0xf]
  %v27 = vld [vmem:[%s1 + $0x4] sm:$0xf]
  %v28 = vld [vmem:[%s1 + $0x8] sm:$0xf]
  %v29 = vld [vmem:[%s1 + $0xc] sm:$0xf]
  %v30 = vld [vmem:[%s2] sm:$0x1]
  %v32 = vlaneseq
  %v33 = vshrl.u32 %v32, 7
  %v34 = vsub.s32 0, %v33
  %v35 = vrot.slane %v30, %v34
  %v39 = vunpack.c.l.b16 %v24
  %v40 = vunpack.c.l.b16 %v25
  %v41 = vpack.c.b16 %v40, %v39
  %v46 = vunpack.c.l.b16 %v26
  %v47 = vunpack.c.l.b16 %v27
  %v48 = vunpack.c.l.b16 %v28
  %v49 = vunpack.c.l.b16 %v29
  %v50 = vpack.c.b16 %v47, %v46
  %v51 = vpack.c.b16 %v49, %v48
  %vm54 = vcmask 261120
  %v56 = vsel %vm54, %v41, 0
  %58 = vmatprep.subr.bf16.mxu0 0
  %59 = vmatpush1.bf16.msra.mxu0 %v50
  %60 = vmatprep.subr.bf16.mxu0 0
  %61 = vmatpush1.bf16.msra.mxu0 %v51
  %62 = vmatprep.subr.bf16.mxu0 0
  %63 = vmatpush1.bf16.msra.mxu0 0
  %64 = vmatprep.subr.bf16.mxu0 0
  %65 = vmatpush1.bf16.msra.mxu0 0
  %66 = vmatprep.subr.bf16.mxu0 0
  %67 = vmatpush1.bf16.msra.mxu0 0
  %68 = vmatprep.subr.bf16.mxu0 0
  %69 = vmatpush1.bf16.msra.mxu0 0
  %70 = vmatprep.subr.bf16.mxu0 0
  %71 = vmatpush1.bf16.msra.mxu0 0
  %72 = vmatprep.subr.bf16.mxu0 0
  %73 = vmatpush1.bf16.msra.mxu0 0
  %74 = vmatprep.subr.bf16.mxu0 0
  %75 = vmatpush1.bf16.msra.mxu0 0
  %76 = vmatprep.subr.bf16.mxu0 0
  %77 = vmatpush1.bf16.msra.mxu0 0
  %78 = vmatprep.subr.bf16.mxu0 0
  %79 = vmatpush1.bf16.msra.mxu0 0
  %80 = vmatprep.subr.bf16.mxu0 0
  %81 = vmatpush1.bf16.msra.mxu0 0
  %82 = vmatprep.subr.bf16.mxu0 0
  %83 = vmatpush1.bf16.msra.mxu0 0
  %84 = vmatprep.subr.bf16.mxu0 0
  %85 = vmatpush1.bf16.msra.mxu0 0
  %86 = vmatprep.subr.bf16.mxu0 0
  %87 = vmatpush1.bf16.msra.mxu0 0
  %88 = vmatprep.subr.bf16.mxu0 0
  %89 = vmatpush1.bf16.msra.mxu0 0
  %90 = vmatprep.mubr.bf16.mxu0 0
  %91 = vmatmul.mubr.bf16.gmra.mrb[0].mxu0 %v56
  %v92 = vpop.f32.mrb[0].mxu0
  %v93 = vadd.f32 %v35, %v92
  %v94 = vpop.f32.mrb[0].mxu0
  %v95 = vpop.f32.mrb[0].mxu0
  %v96 = vadd.f32 %v35, %v95
  %v97 = vpop.f32.mrb[0].mxu0
  %98 = vdwg.mxu0
  %v99 = vld [vmem:[%s3] sm:$0xf]
  %v100 = vld [vmem:[%s3 + $0x4] sm:$0xf]
  %v101 = vunpack.c.l.bf16 %v99
  %v102 = vunpack.c.l.bf16 %v100
  %v103 = vadd.f32 %v93, %v101
  %v104 = vadd.f32 %v96, %v102
  %v105 = vsel %vm54, %v103, 0.0
  %106 = vadd.xlane.f32.xlu0 %v105
  %v107 = vpop.xlane.xlu0 %106
  %v108 = vsel %vm54, %v104, 0.0
  %109 = vadd.xlane.f32.xlu0 %v108
  %v110 = vpop.xlane.xlu0 %109
  %v111 = vrcp.pop 32.0
  %v112 = vmul.f32 %v107, %v111
  %v113 = vmul.f32 %v110, %v111
  %v114 = vsub.f32 %v103, %v112
  %v115 = vsub.f32 %v104, %v113
  %v116 = vmul.f32 %v114, %v114
  %v117 = vmul.f32 %v115, %v115
  %v118 = vsel %vm54, %v116, 0.0
  %119 = vadd.xlane.f32.xlu0 %v118
  %v120 = vpop.xlane.xlu0 %119
  %v121 = vsel %vm54, %v117, 0.0
  %122 = vadd.xlane.f32.xlu0 %v121
  %v123 = vpop.xlane.xlu0 %122
  %v124 = vmul.f32 %v120, %v111
  %v125 = vmul.f32 %v123, %v111
  %v126 = vadd.f32 %v124, 1e-12
  %v127 = vadd.f32 %v125, 1e-12
  %v128 = vrsqrt.pop %v126
  %v129 = vrsqrt.pop %v127
  %v130 = vmul.f32 %v114, %v128
  %v131 = vmul.f32 %v115, %v129
  %v132 = vld [vmem:[%s4] sm:$0x1]
  %v134 = vlaneseq
  %v135 = vshrl.u32 %v134, 7
  %v136 = vsub.s32 0, %v135
  %v137 = vrot.slane %v132, %v136
  %v139 = vmul.f32 %v130, %v137
  %v140 = vmul.f32 %v131, %v137
  %v141 = vld [vmem:[%s5] sm:$0x1]
  %v143 = vlaneseq
  %v144 = vshrl.u32 %v143, 7
  %v145 = vsub.s32 0, %v144
  %v146 = vrot.slane %v141, %v145
  %v148 = vadd.f32 %v139, %v146
  %v149 = vadd.f32 %v140, %v146
  %v150 = vpack.c.bf16 %v149, %v148
  %v152 = vunpack.c.l.b16 %v150
  %v153 = vunpack.c.h.b16 %v150
  %v154 = vpack.c.b16 %v152, %v152
  %v155 = vpack.c.b16 %v153, %v153
  %vm158 = vcmask 257024
  %159 = vst.msk [vmem:[%s6] sm:$0xf] %vm158, %v154
  %160 = vst.msk [vmem:[%s6 + $0x4] sm:$0xf] %vm158, %v155
  // Predicated region
  $region26: #{bert_classifier_forward.16} parent=0 // pred_check
    _
  $region27: #{bert_classifier_forward.16} parent=0 // pred_check_branch
    %162 = sbr.rel (0) target = $region29
  $region28: #{bert_classifier_forward.16} parent=0 // pred_region
    _
  $region29: #{bert_classifier_forward.16} parent=0 // pred_fallthru
    _
  // Predicated region
  $region30: #{bert_classifier_forward.16} parent=0 // pred_check
    _
  $region31: #{bert_classifier_forward.16} parent=0 // pred_check_branch
    %164 = sbr.rel (0) target = $region33
  $region32: #{bert_classifier_forward.16} parent=0 // pred_region
    _
  $region33: #{bert_classifier_forward.16} parent=0 // pred_fallthru
    _

// kernel: bert_classifier_forward.15
$region0: #{bert_classifier_forward.15}
  #allocation0 [shape = 'u32[]', space=smem, size = 0x4, offset = 0x4, fixed_abs, tag = 'smem constant byte address 0x4 - core index']
  #allocation1 [shape = 'u32[144,128]{1,0:T(1,128)}', space=vmem, size = 0x12000, scoped, tag = 'internal scratch']
  #allocation2 [shape = 'f32[2,8,1]{2,1,0:T(8,128)}', space=vmem, size = 0x2000, scoped, tag = 'scratch operand']
  #allocation3 [shape = 'f32[2,8,1]{2,1,0:T(8,128)}', space=vmem, size = 0x2000, scoped, tag = 'scratch operand']
  #allocation4 [shape = 'f32[2,8,16]{2,1,0:T(8,128)}', space=vmem, size = 0x2000, scoped, tag = 'scratch operand']
  %s0 = inlined_call_operand.vmem [shape: bf16[2,2,8,16], index: 0, kind: input, shape index: {}]
  %s1 = inlined_call_operand.vmem [shape: bf16[2,2,8,16], index: 1, kind: input, shape index: {}]
  %s2 = inlined_call_operand.vmem [shape: bf16[2,2,8,16], index: 2, kind: input, shape index: {}]
  %s3 = inlined_call_operand.vmem [shape: f32[2,1,8], index: 3, kind: input, shape index: {}]
  %s4 = inlined_call_operand.vmem [shape: bf16[2,2,8,16], index: 4, kind: output, shape index: {}]
  %s5 = sld [smem:[#allocation0]]
  $region57: #{bert_classifier_forward.15} parent=0
    _
  %s7 = ssub.s32 1, %s5
  %s8 = scalar_select 0, %s7, %s5
  loop: start=0, step=1, limit=4
  $region2: #{bert_classifier_forward.15} parent=0 // loop_pre_header
    _
  $region3: #{bert_classifier_forward.15} parent=0 // loop_header
    %s10 = sphi 0, %s14
    %p11 = scmp.ge.s32.totalorder %s10, 4
    %s17 = sphi 0, %s29
    %s18 = sphi 0, %s25
    %s19 = sphi 0, %s17
    %s20 = sphi 0, %s18
    %s21 = sphi 0, %s19
    %s22 = sphi 0, %s20
    %s32 = sphi 0, %s34
    %s35 = sphi 0, %s32
    %s36 = sphi 0, %s35
    %s52 = sphi 0, %s36
    %s60 = sphi 0, %s62
    %s63 = sphi 0, %s60
    %s64 = sphi 0, %s63
    %s80 = sphi 0, %s64
    %s88 = sphi 0, %s90
    %s91 = sphi 0, %s88
    %s92 = sphi 0, %s91
    %s108 = sphi 0, %s92
    %s116 = sphi 0, %s118
    %s119 = sphi 0, %s116
    %s120 = sphi 0, %s119
    %s136 = sphi 0, %s120
    %s142 = sphi 0, %s144
    %s145 = sphi 0, %s142
    %s146 = sphi 0, %s145
    %s162 = sphi 0, %s146
  $region4: #{bert_classifier_forward.15} parent=0 // loop_header_branch
    %13 = sbr.rel (%p11) target = $region8
  $region5: #{bert_classifier_forward.15} parent=0 // loop_body
    %s15 = ssub.s32 %s10, 1
    %s16 = ssub.s32 %s10, 2
    %s23 = sadd.s32 1, %s18
    %p24 = scmp.ge.s32.totalorder %s23, 1
    %s25 = scalar_select %p24, 0, %s23
    %s26 = sadd.s32 1, %s17
    %s27 = scalar_select %p24, %s26, %s17
    %p28 = scmp.ge.s32.totalorder %s27, 2
    %s29 = scalar_select %p28, 0, %s27
    %s30 = ssub.s32 %s17, %s29
    %p31 = scmp.eq.s32.totalorder %s30, 0
    %s33 = sadd.s32 %s32, 1
    %s34 = scalar_select %p31, %s32, %s33
    %p37 = pneg %p31
    %p38 = scmp.eq.s32.totalorder %s10, 1
    %p39 = por %p37, %p38
    %p40 = scmp.ne.s32.totalorder %s32, %s35
    %p41 = scmp.eq.s32.totalorder %s10, 0
    %p42 = por %p40, %p41
    %p43 = scmp.ne.s32.totalorder %s32, %s35
    %p44 = scmp.eq.s32.totalorder %s15, 1
    %p45 = por %p43, %p44
    %p46 = scmp.ne.s32.totalorder %s35, %s36
    %p47 = scmp.eq.s32.totalorder %s15, 0
    %p48 = por %p46, %p47
    %p49 = scmp.ne.s32.totalorder %s35, %s36
    %p50 = scmp.eq.s32.totalorder %s16, 1
    %p51 = por %p49, %p50
    %p53 = scmp.ne.s32.totalorder %s36, %s52
    %p54 = scmp.eq.s32.totalorder %s16, 0
    %p55 = por %p53, %p54
    %s56 = ssub.s32 %s17, %s29
    %s57 = ssub.s32 %s18, %s25
    %s58 = sor.u32 %s56, %s57
    %p59 = scmp.eq.s32.totalorder %s58, 0
    %s61 = sadd.s32 %s60, 1
    %s62 = scalar_select %p59, %s60, %s61
    %p65 = pneg %p59
    %p66 = scmp.eq.s32.totalorder %s10, 1
    %p67 = por %p65, %p66
    %p68 = scmp.ne.s32.totalorder %s60, %s63
    %p69 = scmp.eq.s32.totalorder %s10, 0
    %p70 = por %p68, %p69
    %p71 = scmp.ne.s32.totalorder %s60, %s63
    %p72 = scmp.eq.s32.totalorder %s15, 1
    %p73 = por %p71, %p72
    %p74 = scmp.ne.s32.totalorder %s63, %s64
    %p75 = scmp.eq.s32.totalorder %s15, 0
    %p76 = por %p74, %p75
    %p77 = scmp.ne.s32.totalorder %s63, %s64
    %p78 = scmp.eq.s32.totalorder %s16, 1
    %p79 = por %p77, %p78
    %p81 = scmp.ne.s32.totalorder %s64, %s80
    %p82 = scmp.eq.s32.totalorder %s16, 0
    %p83 = por %p81, %p82
    %s84 = ssub.s32 %s17, %s29
    %s85 = ssub.s32 %s18, %s25
    %s86 = sor.u32 %s84, %s85
    %p87 = scmp.eq.s32.totalorder %s86, 0
    %s89 = sadd.s32 %s88, 1
    %s90 = scalar_select %p87, %s88, %s89
    %p93 = pneg %p87
    %p94 = scmp.eq.s32.totalorder %s10, 1
    %p95 = por %p93, %p94
    %p96 = scmp.ne.s32.totalorder %s88, %s91
    %p97 = scmp.eq.s32.totalorder %s10, 0
    %p98 = por %p96, %p97
    %p99 = scmp.ne.s32.totalorder %s88, %s91
    %p100 = scmp.eq.s32.totalorder %s15, 1
    %p101 = por %p99, %p100
    %p102 = scmp.ne.s32.totalorder %s91, %s92
    %p103 = scmp.eq.s32.totalorder %s15, 0
    %p104 = por %p102, %p103
    %p105 = scmp.ne.s32.totalorder %s91, %s92
    %p106 = scmp.eq.s32.totalorder %s16, 1
    %p107 = por %p105, %p106
    %p109 = scmp.ne.s32.totalorder %s92, %s108
    %p110 = scmp.eq.s32.totalorder %s16, 0
    %p111 = por %p109, %p110
    %s112 = ssub.s32 %s17, %s29
    %s113 = ssub.s32 %s18, %s25
    %s114 = sor.u32 %s112, %s113
    %p115 = scmp.eq.s32.totalorder %s114, 0
    %s117 = sadd.s32 %s116, 1
    %s118 = scalar_select %p115, %s116, %s117
    %p121 = pneg %p115
    %p122 = scmp.eq.s32.totalorder %s10, 1
    %p123 = por %p121, %p122
    %p124 = scmp.ne.s32.totalorder %s116, %s119
    %p125 = scmp.eq.s32.totalorder %s10, 0
    %p126 = por %p124, %p125
    %p127 = scmp.ne.s32.totalorder %s116, %s119
    %p128 = scmp.eq.s32.totalorder %s15, 1
    %p129 = por %p127, %p128
    %p130 = scmp.ne.s32.totalorder %s119, %s120
    %p131 = scmp.eq.s32.totalorder %s15, 0
    %p132 = por %p130, %p131
    %p133 = scmp.ne.s32.totalorder %s119, %s120
    %p134 = scmp.eq.s32.totalorder %s16, 1
    %p135 = por %p133, %p134
    %p137 = scmp.ne.s32.totalorder %s120, %s136
    %p138 = scmp.eq.s32.totalorder %s16, 0
    %p139 = por %p137, %p138
    %s140 = ssub.s32 %s17, %s29
    %p141 = scmp.eq.s32.totalorder %s140, 0
    %s143 = sadd.s32 %s142, 1
    %s144 = scalar_select %p141, %s142, %s143
    %p147 = pneg %p141
    %p148 = scmp.eq.s32.totalorder %s10, 1
    %p149 = por %p147, %p148
    %p150 = scmp.ne.s32.totalorder %s142, %s145
    %p151 = scmp.eq.s32.totalorder %s10, 0
    %p152 = por %p150, %p151
    %p153 = scmp.ne.s32.totalorder %s142, %s145
    %p154 = scmp.eq.s32.totalorder %s15, 1
    %p155 = por %p153, %p154
    %p156 = scmp.ne.s32.totalorder %s145, %s146
    %p157 = scmp.eq.s32.totalorder %s15, 0
    %p158 = por %p156, %p157
    %p159 = scmp.ne.s32.totalorder %s145, %s146
    %p160 = scmp.eq.s32.totalorder %s16, 1
    %p161 = por %p159, %p160
    %p163 = scmp.ne.s32.totalorder %s146, %s162
    %p164 = scmp.eq.s32.totalorder %s16, 0
    %p165 = por %p163, %p164
    %p166 = scmp.le.s32.totalorder 1, %s10
    %p167 = scmp.lt.s32.totalorder %s10, 3
    %p168 = pnand %p166, %p167
    %p169 = pneg %p168
    // Predicated region
    $region9: #{bert_classifier_forward.15} parent=5 // pred_check
      _
    $region10: #{bert_classifier_forward.15} parent=5 // pred_check_branch
      %171 = sbr.rel (%p168) target = $region12
    $region11: #{bert_classifier_forward.15} parent=5 // pred_region
      %s172 = ssub.s32 %s10, 1
    $region12: #{bert_classifier_forward.15} parent=5 // pred_fallthru
      _
    %p173 = scmp.lt.s32.totalorder %s10, 2
    // Predicated region
    $region13: #{bert_classifier_forward.15} parent=5 // pred_check
      %p174 = pneg %p173
    $region14: #{bert_classifier_forward.15} parent=5 // pred_check_branch
      %176 = sbr.rel (%p174) target = $region16
    $region15: #{bert_classifier_forward.15} parent=5 // pred_region
      // Predicated region
      $region17: #{bert_classifier_forward.15} parent=15 // pred_check
        %p177 = pneg %p42
      $region18: #{bert_classifier_forward.15} parent=15 // pred_check_branch
        %179 = sbr.rel (%p177) target = $region20
      $region19: #{bert_classifier_forward.15} parent=15 // pred_region
        %p180 = scmp.lt.s32.totalorder %s17, 1
        %s181 = scalar_select %p180, %s17, 1
        %s182 = smul.addr %s181, 2
        %s183 = smul.addr %s182, 4
        %s184 = scalar_lea.vmem %s0, %s183
      $region20: #{bert_classifier_forward.15} parent=15 // pred_fallthru
        _
      // Predicated region
      $region21: #{bert_classifier_forward.15} parent=15 // pred_check
        %p185 = pneg %p70
      $region22: #{bert_classifier_forward.15} parent=15 // pred_check_branch
        %187 = sbr.rel (%p185) target = $region24
      $region23: #{bert_classifier_forward.15} parent=15 // pred_region
        %p188 = scmp.lt.s32.totalorder %s17, 1
        %s189 = scalar_select %p188, %s17, 1
        %p190 = scmp.lt.s32.totalorder %s18, 0
        %s191 = scalar_select %p190, %s18, 0
        %s192 = smul.addr %s189, 2
        %s193 = sadd.s32 %s191, %s192
        %s194 = smul.addr %s193, 4
        %s195 = scalar_lea.vmem %s1, %s194
      $region24: #{bert_classifier_forward.15} parent=15 // pred_fallthru
        _
      // Predicated region
      $region25: #{bert_classifier_forward.15} parent=15 // pred_check
        %p196 = pneg %p98
      $region26: #{bert_classifier_forward.15} parent=15 // pred_check_branch
        %198 = sbr.rel (%p196) target = $region28
      $region27: #{bert_classifier_forward.15} parent=15 // pred_region
        %p199 = scmp.lt.s32.totalorder %s17, 1
        %s200 = scalar_select %p199, %s17, 1
        %p201 = scmp.lt.s32.totalorder %s18, 0
        %s202 = scalar_select %p201, %s18, 0
        %s203 = smul.addr %s200, 2
        %s204 = sadd.s32 %s202, %s203
        %s205 = smul.addr %s204, 4
        %s206 = scalar_lea.vmem %s2, %s205
      $region28: #{bert_classifier_forward.15} parent=15 // pred_fallthru
        _
      // Predicated region
      $region29: #{bert_classifier_forward.15} parent=15 // pred_check
        %p207 = pneg %p126
      $region30: #{bert_classifier_forward.15} parent=15 // pred_check_branch
        %209 = sbr.rel (%p207) target = $region32
      $region31: #{bert_classifier_forward.15} parent=15 // pred_region
        %p210 = scmp.lt.s32.totalorder %s17, 1
        %s211 = scalar_select %p210, %s17, 1
        %p212 = scmp.lt.s32.totalorder %s18, 0
        %s213 = scalar_select %p212, %s18, 0
        %s214 = sadd.s32 %s213, %s211
        %s215 = scalar_lea.vmem %s3, %s214
      $region32: #{bert_classifier_forward.15} parent=15 // pred_fallthru
        _
    $region16: #{bert_classifier_forward.15} parent=5 // pred_fallthru
      _
    %p216 = scmp.le.s32.totalorder 1, %s10
    %p217 = scmp.lt.s32.totalorder %s10, 3
    %p218 = pnand %p216, %p217
    %p219 = pneg %p218
    // Predicated region
    $region33: #{bert_classifier_forward.15} parent=5 // pred_check
      _
    $region34: #{bert_classifier_forward.15} parent=5 // pred_check_branch
      %221 = sbr.rel (%p218) target = $region36
    $region35: #{bert_classifier_forward.15} parent=5 // pred_region
      %s222 = ssub.s32 %s10, 1
      %p223 = scmp.lt.s32.totalorder %s19, 1
      %s224 = scalar_select %p223, %s19, 1
      %s225 = smul.addr %s224, 2
      %s226 = smul.addr %s225, 4
      %s227 = scalar_lea.vmem %s0, %s226
      %p228 = pneg %p48
      %p229 = pneg %p45
      %p230 = scmp.lt.s32.totalorder %s19, 1
      %s231 = scalar_select %p230, %s19, 1
      %p232 = scmp.lt.s32.totalorder %s20, 0
      %s233 = scalar_select %p232, %s20, 0
      %s234 = smul.addr %s231, 2
      %s235 = sadd.s32 %s233, %s234
      %s236 = smul.addr %s235, 4
      %s237 = scalar_lea.vmem %s1, %s236
      %p238 = pneg %p76
      %p239 = pneg %p73
      %p240 = scmp.lt.s32.totalorder %s19, 1
      %s241 = scalar_select %p240, %s19, 1
      %p242 = scmp.lt.s32.totalorder %s20, 0
      %s243 = scalar_select %p242, %s20, 0
      %s244 = smul.addr %s241, 2
      %s245 = sadd.s32 %s243, %s244
      %s246 = smul.addr %s245, 4
      %s247 = scalar_lea.vmem %s2, %s246
      %p248 = pneg %p104
      %p249 = pneg %p101
      %p250 = scmp.lt.s32.totalorder %s19, 1
      %s251 = scalar_select %p250, %s19, 1
      %p252 = scmp.lt.s32.totalorder %s20, 0
      %s253 = scalar_select %p252, %s20, 0
      %s254 = sadd.s32 %s253, %s251
      %s255 = scalar_lea.vmem %s3, %s254
      %p256 = pneg %p132
      %p257 = pneg %p129
      %p258 = pneg %p158
      %p259 = pneg %p155
      %p260 = scmp.lt.s32.totalorder %s19, 1
      %s261 = scalar_select %p260, %s19, 1
      %s262 = smul.addr %s261, 2
      %s263 = smul.addr %s262, 4
      %s264 = scalar_lea.vmem %s4, %s263
      %p265 = scmp.lt.s32.totalorder %s19, 1
      %s266 = scalar_select %p265, %s19, 1
      %s267 = smul.addr %s266, 2
      %s268 = smul.addr %s267, 4
      %s269 = scalar_lea.vmem %s0, %s268
      %p270 = scmp.lt.s32.totalorder %s19, 1
      %s271 = scalar_select %p270, %s19, 1
      %p272 = scmp.lt.s32.totalorder %s20, 0
      %s273 = scalar_select %p272, %s20, 0
      %s274 = smul.addr %s271, 2
      %s275 = sadd.s32 %s273, %s274
      %s276 = smul.addr %s275, 4
      %s277 = scalar_lea.vmem %s1, %s276
      %p278 = scmp.lt.s32.totalorder %s19, 1
      %s279 = scalar_select %p278, %s19, 1
      %p280 = scmp.lt.s32.totalorder %s20, 0
      %s281 = scalar_select %p280, %s20, 0
      %s282 = smul.addr %s279, 2
      %s283 = sadd.s32 %s281, %s282
      %s284 = smul.addr %s283, 4
      %s285 = scalar_lea.vmem %s2, %s284
      %p286 = scmp.lt.s32.totalorder %s19, 1
      %s287 = scalar_select %p286, %s19, 1
      %p288 = scmp.lt.s32.totalorder %s20, 0
      %s289 = scalar_select %p288, %s20, 0
      %s290 = sadd.s32 %s289, %s287
      %s291 = scalar_lea.vmem %s3, %s290
      %p292 = scmp.lt.s32.totalorder %s19, 1
      %s293 = scalar_select %p292, %s19, 1
      %s294 = smul.addr %s293, 2
      %s295 = smul.addr %s294, 4
      %s296 = scalar_lea.vmem %s4, %s295
      %p299 = scmp.eq.s32.totalorder %s20, 0
      // Predicated region
      $region37: #{bert_classifier_forward.15} parent=35 // pred_check
        %p300 = pneg %p299
      $region38: #{bert_classifier_forward.15} parent=35 // pred_check_branch
        %302 = sbr.rel (%p300) target = $region40
      $region39: #{bert_classifier_forward.15} parent=35 // pred_region
        %vm303 = vcmask 7168
        %304 = vst.msk [vmem:[#allocation2] sm:$0xff] %vm303, -inf
        %305 = vst.msk [vmem:[#allocation2 + $0x8] sm:$0xff] %vm303, -inf
        %306 = vst.msk [vmem:[#allocation3] sm:$0xff] %vm303, 0.0
        %307 = vst.msk [vmem:[#allocation3 + $0x8] sm:$0xff] %vm303, 0.0
        %vm308 = vcmask 130048
        %309 = vst.msk [vmem:[#allocation4] sm:$0xff] %vm308, 0.0
        %310 = vst.msk [vmem:[#allocation4 + $0x8] sm:$0xff] %vm308, 0.0
      $region40: #{bert_classifier_forward.15} parent=35 // pred_fallthru
        _
      %v311 = vld [vmem:[%s269] sm:$0xf]
      %v312 = vld [vmem:[%s269 + $0x4] sm:$0xf]
      %v313 = vmul.bf16 %v311, 1048592000
      %v314 = vmul.bf16 %v312, 1048592000
      %v315 = vld [vmem:[%s277] sm:$0xf]
      %v316 = vld [vmem:[%s277 + $0x4] sm:$0xf]
      %v317 = vld [vmem:[%s291] sm:$0x1]
      %v319 = vlaneseq
      %v320 = vshrl.u32 %v319, 7
      %v321 = vsub.s32 0, %v320
      %v322 = vrot.slane %v317, %v321
      %vm324 = vcmask 130048
      %v326 = vsel %vm324, %v313, 0
      %v329 = vsel %vm324, %v315, 0
      %331 = vmatprep.subr.bf16.mxu0 0
      %332 = vmatpush1.bf16.xpose.msra.mxu0 %v329
      %333 = vmatprep.subr.bf16.mxu0 0
      %334 = vmatpush1.bf16.xpose.msra.mxu0 0
      %335 = vmatprep.subr.bf16.mxu0 0
      %336 = vmatpush1.bf16.xpose.msra.mxu0 0
      %337 = vmatprep.subr.bf16.mxu0 0
      %338 = vmatpush1.bf16.xpose.msra.mxu0 0
      %339 = vmatprep.subr.bf16.mxu0 0
      %340 = vmatpush1.bf16.xpose.msra.mxu0 0
      %341 = vmatprep.subr.bf16.mxu0 0
      %342 = vmatpush1.bf16.xpose.msra.mxu0 0
      %343 = vmatprep.subr.bf16.mxu0 0
      %344 = vmatpush1.bf16.xpose.msra.mxu0 0
      %345 = vmatprep.subr.bf16.mxu0 0
      %346 = vmatpush1.bf16.xpose.msra.mxu0 0
      %347 = vmatprep.subr.bf16.mxu0 0
      %348 = vmatpush1.bf16.xpose.msra.mxu0 0
      %349 = vmatprep.subr.bf16.mxu0 0
      %350 = vmatpush1.bf16.xpose.msra.mxu0 0
      %351 = vmatprep.subr.bf16.mxu0 0
      %352 = vmatpush1.bf16.xpose.msra.mxu0 0
      %353 = vmatprep.subr.bf16.mxu0 0
      %354 = vmatpush1.bf16.xpose.msra.mxu0 0
      %355 = vmatprep.subr.bf16.mxu0 0
      %356 = vmatpush1.bf16.xpose.msra.mxu0 0
      %357 = vmatprep.subr.bf16.mxu0 0
      %358 = vmatpush1.bf16.xpose.msra.mxu0 0
      %359 = vmatprep.subr.bf16.mxu0 0
      %360 = vmatpush1.bf16.xpose.msra.mxu0 0
      %361 = vmatprep.subr.bf16.mxu0 0
      %362 = vmatpush1.bf16.xpose.msra.mxu0 0
      %363 = vmatprep.mubr.bf16.mxu0 0
      %364 = vmatmul.mubr.bf16.gmra.mrb[0].mxu0 %v326
      %v365 = vpop.f32.mrb[0].mxu0
      %v366 = vadd.f32 %v322, %v365
      %v367 = vpop.f32.mrb[0].mxu0
      %v368 = vpop.f32.mrb[0].mxu0
      %v369 = vpop.f32.mrb[0].mxu0
      %370 = vdwg.mxu0
      %v372 = vsel %vm324, %v314, 0
      %v375 = vsel %vm324, %v316, 0
      %377 = vmatprep.subr.bf16.mxu0 0
      %378 = vmatpush1.bf16.xpose.msra.mxu0 %v375
      %379 = vmatprep.subr.bf16.mxu0 0
      %380 = vmatpush1.bf16.xpose.msra.mxu0 0
      %381 = vmatprep.subr.bf16.mxu0 0
      %382 = vmatpush1.bf16.xpose.msra.mxu0 0
      %383 = vmatprep.subr.bf16.mxu0 0
      %384 = vmatpush1.bf16.xpose.msra.mxu0 0
      %385 = vmatprep.subr.bf16.mxu0 0
      %386 = vmatpush1.bf16.xpose.msra.mxu0 0
      %387 = vmatprep.subr.bf16.mxu0 0
      %388 = vmatpush1.bf16.xpose.msra.mxu0 0
      %389 = vmatprep.subr.bf16.mxu0 0
      %390 = vmatpush1.bf16.xpose.msra.mxu0 0
      %391 = vmatprep.subr.bf16.mxu0 0
      %392 = vmatpush1.bf16.xpose.msra.mxu0 0
      %393 = vmatprep.subr.bf16.mxu0 0
      %394 = vmatpush1.bf16.xpose.msra.mxu0 0
      %395 = vmatprep.subr.bf16.mxu0 0
      %396 = vmatpush1.bf16.xpose.msra.mxu0 0
      %397 = vmatprep.subr.bf16.mxu0 0
      %398 = vmatpush1.bf16.xpose.msra.mxu0 0
      %399 = vmatprep.subr.bf16.mxu0 0
      %400 = vmatpush1.bf16.xpose.msra.mxu0 0
      %401 = vmatprep.subr.bf16.mxu0 0
      %402 = vmatpush1.bf16.xpose.msra.mxu0 0
      %403 = vmatprep.subr.bf16.mxu0 0
      %404 = vmatpush1.bf16.xpose.msra.mxu0 0
      %405 = vmatprep.subr.bf16.mxu0 0
      %406 = vmatpush1.bf16.xpose.msra.mxu0 0
      %407 = vmatprep.subr.bf16.mxu0 0
      %408 = vmatpush1.bf16.xpose.msra.mxu0 0
      %409 = vmatprep.mubr.bf16.mxu0 0
      %410 = vmatmul.mubr.bf16.gmra.mrb[0].mxu0 %v372
      %v411 = vpop.f32.mrb[0].mxu0
      %v412 = vadd.f32 %v322, %v411
      %v413 = vpop.f32.mrb[0].mxu0
      %v414 = vpop.f32.mrb[0].mxu0
      %v415 = vpop.f32.mrb[0].mxu0
      %416 = vdwg.mxu0
      %v417 = vld [vmem:[#allocation2] sm:$0xff]
      %v418 = vld [vmem:[#allocation2 + $0x8] sm:$0xff]
      %vm419 = vcmask 64512
      %v420 = vsel %vm419, %v366, -inf
      %421 = vmax.xlane.f32.xlu0 %v420
      %v422 = vpop.xlane.xlu0 %421
      %v423 = vsel %vm419, %v412, -inf
      %424 = vmax.xlane.f32.xlu0 %v423
      %v425 = vpop.xlane.xlu0 %424
      %v426 = vmax.f32 %v417, %v422
      %v427 = vmax.f32 %v418, %v425
      %v428 = vsub.f32 %v417, %v426
      %v429 = vsub.f32 %v418, %v427
      %v430 = vmul.f32 %v428, 1.442695
      %v431 = vpow.pop %v430
      %v432 = vmul.f32 %v429, 1.442695
      %v433 = vpow.pop %v432
      %435 = vset.pattern.permute.xlu0 0
      %436 = vperm.xlu0 %435, %v426
      %v437 = vpop.permute.xlu0 %436
      %440 = vset.pattern.permute.xlu0 0
      %441 = vperm.xlu0 %440, %v427
      %v442 = vpop.permute.xlu0 %441
      %v444 = vsub.f32 %v366, %v437
      %v445 = vsub.f32 %v412, %v442
      %v446 = vmul.f32 %v444, 1.442695
      %v447 = vpow.pop %v446
      %v448 = vmul.f32 %v445, 1.442695
      %v449 = vpow.pop %v448
      %v450 = vld [vmem:[#allocation3] sm:$0xff]
      %v451 = vld [vmem:[#allocation3 + $0x8] sm:$0xff]
      %v452 = vmul.f32 %v431, %v450
      %v453 = vmul.f32 %v433, %v451
      %v454 = vsel %vm419, %v447, 0.0
      %455 = vadd.xlane.f32.xlu0 %v454
      %v456 = vpop.xlane.xlu0 %455
      %v457 = vsel %vm419, %v449, 0.0
      %458 = vadd.xlane.f32.xlu0 %v457
      %v459 = vpop.xlane.xlu0 %458
      %v460 = vadd.f32 %v452, %v456
      %v461 = vadd.f32 %v453, %v459
      %vm462 = vcmask 7168
      %463 = vst.msk [vmem:[#allocation3] sm:$0xff] %vm462, %v460
      %464 = vst.msk [vmem:[#allocation3 + $0x8] sm:$0xff] %vm462, %v461
      %v465 = vld [vmem:[#allocation4] sm:$0xff]
      %v466 = vld [vmem:[#allocation4 + $0x8] sm:$0xff]
      %468 = vset.pattern.permute.xlu0 0
      %469 = vperm.xlu0 %468, %v431
      %v470 = vpop.permute.xlu0 %469
      %473 = vset.pattern.permute.xlu0 0
      %474 = vperm.xlu0 %473, %v433
      %v475 = vpop.permute.xlu0 %474
      %v477 = vmul.f32 %v470, %v465
      %v478 = vmul.f32 %v475, %v466
      %v479 = vpack.c.bf16 %v447, %v447
      %v480 = vpack.c.bf16 %v449, %v449
      %v481 = vld [vmem:[%s285] sm:$0xf]
      %v482 = vld [vmem:[%s285 + $0x4] sm:$0xf]
      %v484 = vsel %vm419, %v479, 0
      %vm486 = vcmask 1043456
      %v488 = vsel %vm486, %v481, 0
      %490 = vmatprep.subr.bf16.mxu0 0
      %491 = vmatpush1.bf16.msra.mxu0 %v488
      %492 = vmatprep.subr.bf16.mxu0 0
      %493 = vmatpush1.bf16.msra.mxu0 0
      %494 = vmatprep.subr.bf16.mxu0 0
      %495 = vmatpush1.bf16.msra.mxu0 0
      %496 = vmatprep.subr.bf16.mxu0 0
      %497 = vmatpush1.bf16.msra.mxu0 0
      %498 = vmatprep.subr.bf16.mxu0 0
      %499 = vmatpush1.bf16.msra.mxu0 0
      %500 = vmatprep.subr.bf16.mxu0 0
      %501 = vmatpush1.bf16.msra.mxu0 0
      %502 = vmatprep.subr.bf16.mxu0 0
      %503 = vmatpush1.bf16.msra.mxu0 0
      %504 = vmatprep.subr.bf16.mxu0 0
      %505 = vmatpush1.bf16.msra.mxu0 0
      %506 = vmatprep.subr.bf16.mxu0 0
      %507 = vmatpush1.bf16.msra.mxu0 0
      %508 = vmatprep.subr.bf16.mxu0 0
      %509 = vmatpush1.bf16.msra.mxu0 0
      %510 = vmatprep.subr.bf16.mxu0 0
      %511 = vmatpush1.bf16.msra.mxu0 0
      %512 = vmatprep.subr.bf16.mxu0 0
      %513 = vmatpush1.bf16.msra.mxu0 0
      %514 = vmatprep.subr.bf16.mxu0 0
      %515 = vmatpush1.bf16.msra.mxu0 0
      %516 = vmatprep.subr.bf16.mxu0 0
      %517 = vmatpush1.bf16.msra.mxu0 0
      %518 = vmatprep.subr.bf16.mxu0 0
      %519 = vmatpush1.bf16.msra.mxu0 0
      %520 = vmatprep.subr.bf16.mxu0 0
      %521 = vmatpush1.bf16.msra.mxu0 0
      %522 = vmatprep.mubr.bf16.mxu0 0
      %523 = vmatmul.mubr.bf16.gmra.mrb[0].mxu0 %v484
      %v524 = vpop.f32.mrb[0].mxu0
      %v525 = vadd.f32 0.0, %v524
      %v526 = vpop.f32.mrb[0].mxu0
      %v527 = vpop.f32.mrb[0].mxu0
      %v528 = vpop.f32.mrb[0].mxu0
      %529 = vdwg.mxu0
      %v531 = vsel %vm419, %v480, 0
      %v534 = vsel %vm486, %v482, 0
      %536 = vmatprep.subr.bf16.mxu0 0
      %537 = vmatpush1.bf16.msra.mxu0 %v534
      %538 = vmatprep.subr.bf16.mxu0 0
      %539 = vmatpush1.bf16.msra.mxu0 0
      %540 = vmatprep.subr.bf16.mxu0 0
      %541 = vmatpush1.bf16.msra.mxu0 0
      %542 = vmatprep.subr.bf16.mxu0 0
      %543 = vmatpush1.bf16.msra.mxu0 0
      %544 = vmatprep.subr.bf16.mxu0 0
      %545 = vmatpush1.bf16.msra.mxu0 0
      %546 = vmatprep.subr.bf16.mxu0 0
      %547 = vmatpush1.bf16.msra.mxu0 0
      %548 = vmatprep.subr.bf16.mxu0 0
      %549 = vmatpush1.bf16.msra.mxu0 0
      %550 = vmatprep.subr.bf16.mxu0 0
      %551 = vmatpush1.bf16.msra.mxu0 0
      %552 = vmatprep.subr.bf16.mxu0 0
      %553 = vmatpush1.bf16.msra.mxu0 0
      %554 = vmatprep.subr.bf16.mxu0 0
      %555 = vmatpush1.bf16.msra.mxu0 0
      %556 = vmatprep.subr.bf16.mxu0 0
      %557 = vmatpush1.bf16.msra.mxu0 0
      %558 = vmatprep.subr.bf16.mxu0 0
      %559 = vmatpush1.bf16.msra.mxu0 0
      %560 = vmatprep.subr.bf16.mxu0 0
      %561 = vmatpush1.bf16.msra.mxu0 0
      %562 = vmatprep.subr.bf16.mxu0 0
      %563 = vmatpush1.bf16.msra.mxu0 0
      %564 = vmatprep.subr.bf16.mxu0 0
      %565 = vmatpush1.bf16.msra.mxu0 0
      %566 = vmatprep.subr.bf16.mxu0 0
      %567 = vmatpush1.bf16.msra.mxu0 0
      %568 = vmatprep.mubr.bf16.mxu0 0
      %569 = vmatmul.mubr.bf16.gmra.mrb[0].mxu0 %v531
      %v570 = vpop.f32.mrb[0].mxu0
      %v571 = vadd.f32 0.0, %v570
      %v572 = vpop.f32.mrb[0].mxu0
      %v573 = vpop.f32.mrb[0].mxu0
      %v574 = vpop.f32.mrb[0].mxu0
      %575 = vdwg.mxu0
      %v576 = vadd.f32 %v477, %v525
      %v577 = vadd.f32 %v478, %v571
      %578 = vst.msk [vmem:[#allocation4] sm:$0xff] %vm324, %v576
      %579 = vst.msk [vmem:[#allocation4 + $0x8] sm:$0xff] %vm324, %v577
      %580 = vst.msk [vmem:[#allocation2] sm:$0xff] %vm462, %v426
      %581 = vst.msk [vmem:[#allocation2 + $0x8] sm:$0xff] %vm462, %v427
      // Predicated region
      $region41: #{bert_classifier_forward.15} parent=35 // pred_check
        %p582 = pneg %p299
      $region42: #{bert_classifier_forward.15} parent=35 // pred_check_branch
        %584 = sbr.rel (%p582) target = $region44
      $region43: #{bert_classifier_forward.15} parent=35 // pred_region
        %v585 = vld [vmem:[#allocation4] sm:$0xff]
        %v586 = vld [vmem:[#allocation4 + $0x8] sm:$0xff]
        %v587 = vld [vmem:[#allocation3] sm:$0xff]
        %v588 = vld [vmem:[#allocation3 + $0x8] sm:$0xff]
        %590 = vset.pattern.permute.xlu0 0
        %591 = vperm.xlu0 %590, %v587
        %v592 = vpop.permute.xlu0 %591
        %595 = vset.pattern.permute.xlu0 0
        %596 = vperm.xlu0 %595, %v588
        %v597 = vpop.permute.xlu0 %596
        %v599 = vrcp.pop %v592
        %v600 = vmul.f32 %v585, %v599
        %v601 = vrcp.pop %v597
        %v602 = vmul.f32 %v586, %v601
        %v603 = vpack.c.bf16 %v600, %v600
        %v604 = vpack.c.bf16 %v602, %v602
        %vm605 = vcmask 125952
        %606 = vst.msk [vmem:[%s296] sm:$0xf] %vm605, %v603
        %607 = vst.msk [vmem:[%s296 + $0x4] sm:$0xf] %vm605, %v604
      $region44: #{bert_classifier_forward.15} parent=35 // pred_fallthru
        _
      %p608 = scmp.lt.s32.totalorder %s19, 1
      %s609 = scalar_select %p608, %s19, 1
      %s610 = smul.addr %s609, 2
      %s611 = smul.addr %s610, 4
      %s612 = scalar_lea.vmem %s4, %s611
      // Predicated region
      $region45: #{bert_classifier_forward.15} parent=35 // pred_check
        %p613 = pneg %p155
      $region46: #{bert_classifier_forward.15} parent=35 // pred_check_branch
        %615 = sbr.rel (%p613) target = $region48
      $region47: #{bert_classifier_forward.15} parent=35 // pred_region
        _
      $region48: #{bert_classifier_forward.15} parent=35 // pred_fallthru
        _
    $region36: #{bert_classifier_forward.15} parent=5 // pred_fallthru
      _
    %p616 = scmp.le.s32.totalorder 2, %s10
    // Predicated region
    $region49: #{bert_classifier_forward.15} parent=5 // pred_check
      %p617 = pneg %p616
    $region50: #{bert_classifier_forward.15} parent=5 // pred_check_branch
      %619 = sbr.rel (%p617) target = $region52
    $region51: #{bert_classifier_forward.15} parent=5 // pred_region
      %s620 = ssub.s32 %s10, 2
      // Predicated region
      $region53: #{bert_classifier_forward.15} parent=51 // pred_check
        %p621 = pneg %p161
      $region54: #{bert_classifier_forward.15} parent=51 // pred_check_branch
        %623 = sbr.rel (%p621) target = $region56
      $region55: #{bert_classifier_forward.15} parent=51 // pred_region
        %p624 = scmp.lt.s32.totalorder %s21, 1
        %s625 = scalar_select %p624, %s21, 1
        %s626 = smul.addr %s625, 2
        %s627 = smul.addr %s626, 4
        %s628 = scalar_lea.vmem %s4, %s627
      $region56: #{bert_classifier_forward.15} parent=51 // pred_fallthru
        _
    $region52: #{bert_classifier_forward.15} parent=5 // pred_fallthru
      _
  $region6: #{bert_classifier_forward.15} parent=0 // loop_footer
    %s14 = sadd.s32 1, %s10
  $region7: #{bert_classifier_forward.15} parent=0 // loop_footer_branch
    %9 = sbr.rel target = $region3
  $region8: #{bert_classifier_forward.15} parent=0 // loop_exit
    _

// kernel: bert_classifier_forward.17
$region0: #{bert_classifier_forward.17}
  #allocation0 [shape = 'u32[]', space=smem, size = 0x4, offset = 0x4, fixed_abs, tag = 'smem constant byte address 0x4 - core index']
  #allocation1 [shape = 'u32[144,128]{1,0:T(1,128)}', space=vmem, size = 0x12000, scoped, tag = 'internal scratch']
  %s0 = inlined_call_operand.vmem [shape: bf16[16,32], index: 0, kind: input, shape index: {}]
  %s1 = inlined_call_operand.vmem [shape: bf16[32,64], index: 1, kind: input, shape index: {}]
  %s2 = inlined_call_operand.vmem [shape: f32[1,64], index: 2, kind: input, shape index: {}]
  %s3 = inlined_call_operand.vmem [shape: bf16[16,64], index: 3, kind: output, shape index: {}]
  %s4 = sld [smem:[#allocation0]]
  $region22: #{bert_classifier_forward.17} parent=0
    _
  %s6 = ssub.s32 1, %s4
  %s7 = scalar_select 0, %s6, %s4
  // Predicated region
  $region2: #{bert_classifier_forward.17} parent=0 // pred_check
    _
  $region3: #{bert_classifier_forward.17} parent=0 // pred_check_branch
    %9 = sbr.rel (0) target = $region5
  $region4: #{bert_classifier_forward.17} parent=0 // pred_region
    _
  $region5: #{bert_classifier_forward.17} parent=0 // pred_fallthru
    _
  // Predicated region
  $region6: #{bert_classifier_forward.17} parent=0 // pred_check
    _
  $region7: #{bert_classifier_forward.17} parent=0 // pred_check_branch
    %11 = sbr.rel (0) target = $region9
  $region8: #{bert_classifier_forward.17} parent=0 // pred_region
    _
  $region9: #{bert_classifier_forward.17} parent=0 // pred_fallthru
    _
  // Predicated region
  $region10: #{bert_classifier_forward.17} parent=0 // pred_check
    _
  $region11: #{bert_classifier_forward.17} parent=0 // pred_check_branch
    %13 = sbr.rel (0) target = $region13
  $region12: #{bert_classifier_forward.17} parent=0 // pred_region
    _
  $region13: #{bert_classifier_forward.17} parent=0 // pred_fallthru
    _
  %v15 = vld [vmem:[%s0] sm:$0xf]
  %v16 = vld [vmem:[%s0 + $0x4] sm:$0xf]
  %v17 = vld [vmem:[%s1] sm:$0xf]
  %v18 = vld [vmem:[%s1 + $0x4] sm:$0xf]
  %v19 = vld [vmem:[%s1 + $0x8] sm:$0xf]
  %v20 = vld [vmem:[%s1 + $0xc] sm:$0xf]
  %v21 = vld [vmem:[%s2] sm:$0x1]
  %v23 = vlaneseq
  %v24 = vshrl.u32 %v23, 7
  %v25 = vsub.s32 0, %v24
  %v26 = vrot.slane %v21, %v25
  %v30 = vunpack.c.l.b16 %v15
  %v31 = vunpack.c.l.b16 %v16
  %v32 = vpack.c.b16 %v31, %v30
  %v37 = vunpack.c.l.b16 %v17
  %v38 = vunpack.c.l.b16 %v18
  %v39 = vunpack.c.l.b16 %v19
  %v40 = vunpack.c.l.b16 %v20
  %v41 = vpack.c.b16 %v38, %v37
  %v42 = vpack.c.b16 %v40, %v39
  %vm45 = vcmask 261120
  %v47 = vsel %vm45, %v32, 0
  %49 = vmatprep.subr.bf16.mxu0 0
  %50 = vmatpush1.bf16.msra.mxu0 %v41
  %51 = vmatprep.subr.bf16.mxu0 0
  %52 = vmatpush1.bf16.msra.mxu0 %v42
  %53 = vmatprep.subr.bf16.mxu0 0
  %54 = vmatpush1.bf16.msra.mxu0 0
  %55 = vmatprep.subr.bf16.mxu0 0
  %56 = vmatpush1.bf16.msra.mxu0 0
  %57 = vmatprep.subr.bf16.mxu0 0
  %58 = vmatpush1.bf16.msra.mxu0 0
  %59 = vmatprep.subr.bf16.mxu0 0
  %60 = vmatpush1.bf16.msra.mxu0 0
  %61 = vmatprep.subr.bf16.mxu0 0
  %62 = vmatpush1.bf16.msra.mxu0 0
  %63 = vmatprep.subr.bf16.mxu0 0
  %64 = vmatpush1.bf16.msra.mxu0 0
  %65 = vmatprep.subr.bf16.mxu0 0
  %66 = vmatpush1.bf16.msra.mxu0 0
  %67 = vmatprep.subr.bf16.mxu0 0
  %68 = vmatpush1.bf16.msra.mxu0 0
  %69 = vmatprep.subr.bf16.mxu0 0
  %70 = vmatpush1.bf16.msra.mxu0 0
  %71 = vmatprep.subr.bf16.mxu0 0
  %72 = vmatpush1.bf16.msra.mxu0 0
  %73 = vmatprep.subr.bf16.mxu0 0
  %74 = vmatpush1.bf16.msra.mxu0 0
  %75 = vmatprep.subr.bf16.mxu0 0
  %76 = vmatpush1.bf16.msra.mxu0 0
  %77 = vmatprep.subr.bf16.mxu0 0
  %78 = vmatpush1.bf16.msra.mxu0 0
  %79 = vmatprep.subr.bf16.mxu0 0
  %80 = vmatpush1.bf16.msra.mxu0 0
  %81 = vmatprep.mubr.bf16.mxu0 0
  %82 = vmatmul.mubr.bf16.gmra.mrb[0].mxu0 %v47
  %v83 = vpop.f32.mrb[0].mxu0
  %v84 = vadd.f32 %v26, %v83
  %v85 = vpop.f32.mrb[0].mxu0
  %v86 = vpop.f32.mrb[0].mxu0
  %v87 = vadd.f32 %v26, %v86
  %v88 = vpop.f32.mrb[0].mxu0
  %89 = vdwg.mxu0
  %v90 = vmul.f32 %v84, 0.5
  %v91 = vmul.f32 %v87, 0.5
  %v92 = vmul.f32 %v84, 0.044715
  %v93 = vmul.f32 %v87, 0.044715
  %v94 = vmul.f32 %v92, %v84
  %v95 = vmul.f32 %v93, %v87
  %v96 = vmul.f32 %v94, %v84
  %v97 = vmul.f32 %v95, %v87
  %v98 = vadd.f32 %v84, %v96
  %v99 = vadd.f32 %v87, %v97
  %v100 = vmul.f32 %v98, 0.7978846
  %v101 = vmul.f32 %v99, 0.7978846
  %v102 = vtanh.pop %v100
  %v103 = vtanh.pop %v101
  %v104 = vadd.f32 %v102, 1.0
  %v105 = vadd.f32 %v103, 1.0
  %v106 = vmul.f32 %v90, %v104
  %v107 = vmul.f32 %v91, %v105
  %v108 = vpack.c.bf16 %v107, %v106
  %v110 = vunpack.c.l.b16 %v108
  %v111 = vunpack.c.h.b16 %v108
  %v112 = vpack.c.b16 %v110, %v110
  %v113 = vpack.c.b16 %v111, %v111
  %vm116 = vcmask 519168
  %117 = vst.msk [vmem:[%s3] sm:$0xf] %vm116, %v112
  %118 = vst.msk [vmem:[%s3 + $0x4] sm:$0xf] %vm116, %v113
  // Predicated region
  $region14: #{bert_classifier_forward.17} parent=0 // pred_check
    _
  $region15: #{bert_classifier_forward.17} parent=0 // pred_check_branch
    %120 = sbr.rel (0) target = $region17
  $region16: #{bert_classifier_forward.17} parent=0 // pred_region
    _
  $region17: #{bert_classifier_forward.17} parent=0 // pred_fallthru
    _
  // Predicated region
  $region18: #{bert_classifier_forward.17} parent=0 // pred_check
    _
  $region19: #{bert_classifier_forward.17} parent=0 // pred_check_branch
    %122 = sbr.rel (0) target = $region21
  $region20: #{bert_classifier_forward.17} parent=0 // pred_region
    _
  $region21: #{bert_classifier_forward.17} parent=0 // pred_fallthru
    _

// kernel: bert_classifier_forward.18
$region0: #{bert_classifier_forward.18}
  #allocation0 [shape = 'u32[]', space=smem, size = 0x4, offset = 0x4, fixed_abs, tag = 'smem constant byte address 0x4 - core index']
  #allocation1 [shape = 'u32[144,128]{1,0:T(1,128)}', space=vmem, size = 0x12000, scoped, tag = 'internal scratch']
  %s0 = inlined_call_operand.vmem [shape: bf16[16,64], index: 0, kind: input, shape index: {}]
  %s1 = inlined_call_operand.vmem [shape: bf16[64,32], index: 1, kind: input, shape index: {}]
  %s2 = inlined_call_operand.vmem [shape: f32[1,32], index: 2, kind: input, shape index: {}]
  %s3 = inlined_call_operand.vmem [shape: bf16[16,32], index: 3, kind: input, shape index: {}]
  %s4 = inlined_call_operand.vmem [shape: f32[1,32], index: 4, kind: input, shape index: {}]
  %s5 = inlined_call_operand.vmem [shape: f32[1,32], index: 5, kind: input, shape index: {}]
  %s6 = inlined_call_operand.vmem [shape: bf16[16,32], index: 6, kind: output, shape index: {}]
  %s7 = sld [smem:[#allocation0]]
  $region34: #{bert_classifier_forward.18} parent=0
    _
  %s9 = ssub.s32 1, %s7
  %s10 = scalar_select 0, %s9, %s7
  // Predicated region
  $region2: #{bert_classifier_forward.18} parent=0 // pred_check
    _
  $region3: #{bert_classifier_forward.18} parent=0 // pred_check_branch
    %12 = sbr.rel (0) target = $region5
  $region4: #{bert_classifier_forward.18} parent=0 // pred_region
    _
  $region5: #{bert_classifier_forward.18} parent=0 // pred_fallthru
    _
  // Predicated region
  $region6: #{bert_classifier_forward.18} parent=0 // pred_check
    _
  $region7: #{bert_classifier_forward.18} parent=0 // pred_check_branch
    %14 = sbr.rel (0) target = $region9
  $region8: #{bert_classifier_forward.18} parent=0 // pred_region
    _
  $region9: #{bert_classifier_forward.18} parent=0 // pred_fallthru
    _
  // Predicated region
  $region10: #{bert_classifier_forward.18} parent=0 // pred_check
    _
  $region11: #{bert_classifier_forward.18} parent=0 // pred_check_branch
    %16 = sbr.rel (0) target = $region13
  $region12: #{bert_classifier_forward.18} parent=0 // pred_region
    _
  $region13: #{bert_classifier_forward.18} parent=0 // pred_fallthru
    _
  // Predicated region
  $region14: #{bert_classifier_forward.18} parent=0 // pred_check
    _
  $region15: #{bert_classifier_forward.18} parent=0 // pred_check_branch
    %18 = sbr.rel (0) target = $region17
  $region16: #{bert_classifier_forward.18} parent=0 // pred_region
    _
  $region17: #{bert_classifier_forward.18} parent=0 // pred_fallthru
    _
  // Predicated region
  $region18: #{bert_classifier_forward.18} parent=0 // pred_check
    _
  $region19: #{bert_classifier_forward.18} parent=0 // pred_check_branch
    %20 = sbr.rel (0) target = $region21
  $region20: #{bert_classifier_forward.18} parent=0 // pred_region
    _
  $region21: #{bert_classifier_forward.18} parent=0 // pred_fallthru
    _
  // Predicated region
  $region22: #{bert_classifier_forward.18} parent=0 // pred_check
    _
  $region23: #{bert_classifier_forward.18} parent=0 // pred_check_branch
    %22 = sbr.rel (0) target = $region25
  $region24: #{bert_classifier_forward.18} parent=0 // pred_region
    _
  $region25: #{bert_classifier_forward.18} parent=0 // pred_fallthru
    _
  %v24 = vld [vmem:[%s0] sm:$0xf]
  %v25 = vld [vmem:[%s0 + $0x4] sm:$0xf]
  %v26 = vld [vmem:[%s1] sm:$0xf]
  %v27 = vld [vmem:[%s1 + $0x4] sm:$0xf]
  %v28 = vld [vmem:[%s1 + $0x8] sm:$0xf]
  %v29 = vld [vmem:[%s1 + $0xc] sm:$0xf]
  %v30 = vld [vmem:[%s1 + $0x10] sm:$0xf]
  %v31 = vld [vmem:[%s1 + $0x14] sm:$0xf]
  %v32 = vld [vmem:[%s1 + $0x18] sm:$0xf]
  %v33 = vld [vmem:[%s1 + $0x1c] sm:$0xf]
  %v34 = vld [vmem:[%s2] sm:$0x1]
  %v36 = vlaneseq
  %v37 = vshrl.u32 %v36, 7
  %v38 = vsub.s32 0, %v37
  %v39 = vrot.slane %v34, %v38
  %v43 = vunpack.c.l.b16 %v24
  %v44 = vunpack.c.l.b16 %v25
  %v45 = vpack.c.b16 %v44, %v43
  %v54 = vunpack.c.l.b16 %v26
  %v55 = vunpack.c.l.b16 %v27
  %v56 = vunpack.c.l.b16 %v28
  %v57 = vunpack.c.l.b16 %v29
  %v58 = vunpack.c.l.b16 %v30
  %v59 = vunpack.c.l.b16 %v31
  %v60 = vunpack.c.l.b16 %v32
  %v61 = vunpack.c.l.b16 %v33
  %v62 = vpack.c.b16 %v55, %v54
  %v63 = vpack.c.b16 %v57, %v56
  %v64 = vpack.c.b16 %v59, %v58
  %v65 = vpack.c.b16 %v61, %v60
  %vm70 = vcmask 523264
  %v72 = vsel %vm70, %v45, 0
  %74 = vmatprep.subr.bf16.mxu0 0
  %75 = vmatpush1.bf16.msra.mxu0 %v62
  %76 = vmatprep.subr.bf16.mxu0 0
  %77 = vmatpush1.bf16.msra.mxu0 %v63
  %78 = vmatprep.subr.bf16.mxu0 0
  %79 = vmatpush1.bf16.msra.mxu0 %v64
  %80 = vmatprep.subr.bf16.mxu0 0
  %81 = vmatpush1.bf16.msra.mxu0 %v65
  %82 = vmatprep.subr.bf16.mxu0 0
  %83 = vmatpush1.bf16.msra.mxu0 0
  %84 = vmatprep.subr.bf16.mxu0 0
  %85 = vmatpush1.bf16.msra.mxu0 0
  %86 = vmatprep.subr.bf16.mxu0 0
  %87 = vmatpush1.bf16.msra.mxu0 0
  %88 = vmatprep.subr.bf16.mxu0 0
  %89 = vmatpush1.bf16.msra.mxu0 0
  %90 = vmatprep.subr.bf16.mxu0 0
  %91 = vmatpush1.bf16.msra.mxu0 0
  %92 = vmatprep.subr.bf16.mxu0 0
  %93 = vmatpush1.bf16.msra.mxu0 0
  %94 = vmatprep.subr.bf16.mxu0 0
  %95 = vmatpush1.bf16.msra.mxu0 0
  %96 = vmatprep.subr.bf16.mxu0 0
  %97 = vmatpush1.bf16.msra.mxu0 0
  %98 = vmatprep.subr.bf16.mxu0 0
  %99 = vmatpush1.bf16.msra.mxu0 0
  %100 = vmatprep.subr.bf16.mxu0 0
  %101 = vmatpush1.bf16.msra.mxu0 0
  %102 = vmatprep.subr.bf16.mxu0 0
  %103 = vmatpush1.bf16.msra.mxu0 0
  %104 = vmatprep.subr.bf16.mxu0 0
  %105 = vmatpush1.bf16.msra.mxu0 0
  %106 = vmatprep.mubr.bf16.mxu0 0
  %107 = vmatmul.mubr.bf16.gmra.mrb[0].mxu0 %v72
  %v108 = vpop.f32.mrb[0].mxu0
  %v109 = vadd.f32 %v39, %v108
  %v110 = vpop.f32.mrb[0].mxu0
  %v111 = vpop.f32.mrb[0].mxu0
  %v112 = vadd.f32 %v39, %v111
  %v113 = vpop.f32.mrb[0].mxu0
  %114 = vdwg.mxu0
  %v115 = vld [vmem:[%s3] sm:$0xf]
  %v116 = vld [vmem:[%s3 + $0x4] sm:$0xf]
  %v117 = vunpack.c.l.bf16 %v115
  %v118 = vunpack.c.l.bf16 %v116
  %v119 = vadd.f32 %v109, %v117
  %v120 = vadd.f32 %v112, %v118
  %vm121 = vcmask 261120
  %v122 = vsel %vm121, %v119, 0.0
  %123 = vadd.xlane.f32.xlu0 %v122
  %v124 = vpop.xlane.xlu0 %123
  %v125 = vsel %vm121, %v120, 0.0
  %126 = vadd.xlane.f32.xlu0 %v125
  %v127 = vpop.xlane.xlu0 %126
  %v128 = vrcp.pop 32.0
  %v129 = vmul.f32 %v124, %v128
  %v130 = vmul.f32 %v127, %v128
  %v131 = vsub.f32 %v119, %v129
  %v132 = vsub.f32 %v120, %v130
  %v133 = vmul.f32 %v131, %v131
  %v134 = vmul.f32 %v132, %v132
  %v135 = vsel %vm121, %v133, 0.0
  %136 = vadd.xlane.f32.xlu0 %v135
  %v137 = vpop.xlane.xlu0 %136
  %v138 = vsel %vm121, %v134, 0.0
  %139 = vadd.xlane.f32.xlu0 %v138
  %v140 = vpop.xlane.xlu0 %139
  %v141 = vmul.f32 %v137, %v128
  %v142 = vmul.f32 %v140, %v128
  %v143 = vadd.f32 %v141, 1e-12
  %v144 = vadd.f32 %v142, 1e-12
  %v145 = vrsqrt.pop %v143
  %v146 = vrsqrt.pop %v144
  %v147 = vmul.f32 %v131, %v145
  %v148 = vmul.f32 %v132, %v146
  %v149 = vld [vmem:[%s4] sm:$0x1]
  %v151 = vlaneseq
  %v152 = vshrl.u32 %v151, 7
  %v153 = vsub.s32 0, %v152
  %v154 = vrot.slane %v149, %v153
  %v156 = vmul.f32 %v147, %v154
  %v157 = vmul.f32 %v148, %v154
  %v158 = vld [vmem:[%s5] sm:$0x1]
  %v160 = vlaneseq
  %v161 = vshrl.u32 %v160, 7
  %v162 = vsub.s32 0, %v161
  %v163 = vrot.slane %v158, %v162
  %v165 = vadd.f32 %v156, %v163
  %v166 = vadd.f32 %v157, %v163
  %v167 = vpack.c.bf16 %v166, %v165
  %v169 = vunpack.c.l.b16 %v167
  %v170 = vunpack.c.h.b16 %v167
  %v171 = vpack.c.b16 %v169, %v169
  %v172 = vpack.c.b16 %v170, %v170
  %vm175 = vcmask 257024
  %176 = vst.msk [vmem:[%s6] sm:$0xf] %vm175, %v171
  %177 = vst.msk [vmem:[%s6 + $0x4] sm:$0xf] %vm175, %v172
  // Predicated region
  $region26: #{bert_classifier_forward.18} parent=0 // pred_check
    _
  $region27: #{bert_classifier_forward.18} parent=0 // pred_check_branch
    %179 = sbr.rel (0) target = $region29
  $region28: #{bert_classifier_forward.18} parent=0 // pred_region
    _
  $region29: #{bert_classifier_forward.18} parent=0 // pred_fallthru
    _
  // Predicated region
  $region30: #{bert_classifier_forward.18} parent=0 // pred_check
    _
  $region31: #{bert_classifier_forward.18} parent=0 // pred_check_branch
    %181 = sbr.rel (0) target = $region33
  $region32: #{bert_classifier_forward.18} parent=0 // pred_region
    _
  $region33: #{bert_classifier_forward.18} parent=0 // pred_fallthru
    _

// kernel: bert_classifier_forward.24
$region0: #{bert_classifier_forward.24}
  #allocation0 [shape = 'u32[]', space=smem, size = 0x4, offset = 0x4, fixed_abs, tag = 'smem constant byte address 0x4 - core index']
  #allocation1 [shape = 'u32[144,128]{1,0:T(1,128)}', space=vmem, size = 0x12000, scoped, tag = 'internal scratch']
  %s0 = inlined_call_operand.vmem [shape: bf16[2,32], index: 0, kind: input, shape index: {}]
  %s1 = inlined_call_operand.vmem [shape: bf16[32,32], index: 1, kind: input, shape index: {}]
  %s2 = inlined_call_operand.vmem [shape: f32[1,32], index: 2, kind: input, shape index: {}]
  %s3 = inlined_call_operand.vmem [shape: bf16[2,32], index: 3, kind: output, shape index: {}]
  %s4 = sld [smem:[#allocation0]]
  $region22: #{bert_classifier_forward.24} parent=0
    _
  %s6 = ssub.s32 1, %s4
  %s7 = scalar_select 0, %s6, %s4
  // Predicated region
  $region2: #{bert_classifier_forward.24} parent=0 // pred_check
    _
  $region3: #{bert_classifier_forward.24} parent=0 // pred_check_branch
    %9 = sbr.rel (0) target = $region5
  $region4: #{bert_classifier_forward.24} parent=0 // pred_region
    _
  $region5: #{bert_classifier_forward.24} parent=0 // pred_fallthru
    _
  // Predicated region
  $region6: #{bert_classifier_forward.24} parent=0 // pred_check
    _
  $region7: #{bert_classifier_forward.24} parent=0 // pred_check_branch
    %11 = sbr.rel (0) target = $region9
  $region8: #{bert_classifier_forward.24} parent=0 // pred_region
    _
  $region9: #{bert_classifier_forward.24} parent=0 // pred_fallthru
    _
  // Predicated region
  $region10: #{bert_classifier_forward.24} parent=0 // pred_check
    _
  $region11: #{bert_classifier_forward.24} parent=0 // pred_check_branch
    %13 = sbr.rel (0) target = $region13
  $region12: #{bert_classifier_forward.24} parent=0 // pred_region
    _
  $region13: #{bert_classifier_forward.24} parent=0 // pred_fallthru
    _
  %v15 = vld [vmem:[%s0] sm:$0x1]
  %v16 = vld [vmem:[%s1] sm:$0xf]
  %v17 = vld [vmem:[%s1 + $0x4] sm:$0xf]
  %v18 = vld [vmem:[%s1 + $0x8] sm:$0xf]
  %v19 = vld [vmem:[%s1 + $0xc] sm:$0xf]
  %v20 = vld [vmem:[%s2] sm:$0x1]
  %v22 = vlaneseq
  %v23 = vshrl.u32 %v22, 7
  %v24 = vsub.s32 0, %v23
  %v25 = vrot.slane %v20, %v24
  %v31 = vunpack.c.l.b16 %v16
  %v32 = vunpack.c.l.b16 %v17
  %v33 = vunpack.c.l.b16 %v18
  %v34 = vunpack.c.l.b16 %v19
  %v35 = vpack.c.b16 %v32, %v31
  %v36 = vpack.c.b16 %v34, %v33
  %vm39 = vcmask 261120
  %v41 = vsel %vm39, %v15, 0
  %43 = vmatprep.subr.bf16.mxu0 0
  %44 = vmatpush1.bf16.msra.mxu0 %v35
  %45 = vmatprep.subr.bf16.mxu0 0
  %46 = vmatpush1.bf16.msra.mxu0 %v36
  %47 = vmatprep.subr.bf16.mxu0 0
  %48 = vmatpush1.bf16.msra.mxu0 0
  %49 = vmatprep.subr.bf16.mxu0 0
  %50 = vmatpush1.bf16.msra.mxu0 0
  %51 = vmatprep.subr.bf16.mxu0 0
  %52 = vmatpush1.bf16.msra.mxu0 0
  %53 = vmatprep.subr.bf16.mxu0 0
  %54 = vmatpush1.bf16.msra.mxu0 0
  %55 = vmatprep.subr.bf16.mxu0 0
  %56 = vmatpush1.bf16.msra.mxu0 0
  %57 = vmatprep.subr.bf16.mxu0 0
  %58 = vmatpush1.bf16.msra.mxu0 0
  %59 = vmatprep.subr.bf16.mxu0 0
  %60 = vmatpush1.bf16.msra.mxu0 0
  %61 = vmatprep.subr.bf16.mxu0 0
  %62 = vmatpush1.bf16.msra.mxu0 0
  %63 = vmatprep.subr.bf16.mxu0 0
  %64 = vmatpush1.bf16.msra.mxu0 0
  %65 = vmatprep.subr.bf16.mxu0 0
  %66 = vmatpush1.bf16.msra.mxu0 0
  %67 = vmatprep.subr.bf16.mxu0 0
  %68 = vmatpush1.bf16.msra.mxu0 0
  %69 = vmatprep.subr.bf16.mxu0 0
  %70 = vmatpush1.bf16.msra.mxu0 0
  %71 = vmatprep.subr.bf16.mxu0 0
  %72 = vmatpush1.bf16.msra.mxu0 0
  %73 = vmatprep.subr.bf16.mxu0 0
  %74 = vmatpush1.bf16.msra.mxu0 0
  %75 = vmatprep.mubr.bf16.mxu0 0
  %76 = vmatmul.mubr.bf16.gmra.mrb[0].mxu0 %v41
  %v77 = vpop.f32.mrb[0].mxu0
  %v78 = vadd.f32 %v25, %v77
  %v79 = vpop.f32.mrb[0].mxu0
  %v80 = vpop.f32.mrb[0].mxu0
  %v81 = vpop.f32.mrb[0].mxu0
  %82 = vdwg.mxu0
  %v83 = vtanh.pop %v78
  %v84 = vpack.c.bf16 %v83, %v83
  %vm85 = vcmask 253952
  %86 = vst.msk [vmem:[%s3] sm:$0x1] %vm85, %v84
  // Predicated region
  $region14: #{bert_classifier_forward.24} parent=0 // pred_check
    _
  $region15: #{bert_classifier_forward.24} parent=0 // pred_check_branch
    %88 = sbr.rel (0) target = $region17
  $region16: #{bert_classifier_forward.24} parent=0 // pred_region
    _
  $region17: #{bert_classifier_forward.24} parent=0 // pred_fallthru
    _
  // Predicated region
  $region18: #{bert_classifier_forward.24} parent=0 // pred_check
    _
  $region19: #{bert_classifier_forward.24} parent=0 // pred_check_branch
    %90 = sbr.rel (0) target = $region21
  $region20: #{bert_classifier_forward.24} parent=0 // pred_region
    _
  $region21: #{bert_classifier_forward.24} parent=0 // pred_fallthru
    _

// kernel: bert_classifier_forward.25
$region0: #{bert_classifier_forward.25}
  #allocation0 [shape = 'u32[]', space=smem, size = 0x4, offset = 0x4, fixed_abs, tag = 'smem constant byte address 0x4 - core index']
  #allocation1 [shape = 'u32[144,128]{1,0:T(1,128)}', space=vmem, size = 0x12000, scoped, tag = 'internal scratch']
  %s0 = inlined_call_operand.vmem [shape: bf16[2,32], index: 0, kind: input, shape index: {}]
  %s1 = inlined_call_operand.vmem [shape: bf16[32,128], index: 1, kind: input, shape index: {}]
  %s2 = inlined_call_operand.vmem [shape: f32[1,128], index: 2, kind: input, shape index: {}]
  %s3 = inlined_call_operand.hbm [shape: f32[2,128], index: 3, kind: output, shape index: {}]
  %s4 = sld [smem:[#allocation0]]
  $region22: #{bert_classifier_forward.25} parent=0
    _
  %s6 = ssub.s32 1, %s4
  %s7 = scalar_select 0, %s6, %s4
  $region1: #{bert_classifier_forward.25} parent=0
    #allocation2 [shape = 'u8[1024]{0}', space=vmem, size = 0x400, scoped, tag = 'output window, operand 0, single buffered']
    #allocation3 [shape = 's32[1]{0}', space=sflag, size = 0x4, scoped, tag = 'scoped memory for bert_classifier_forward.25']
    %8 = vsyncpa [#allocation3], 0
    // Predicated region
    $region2: #{bert_classifier_forward.25} parent=1 // pred_check
      _
    $region3: #{bert_classifier_forward.25} parent=1 // pred_check_branch
      %10 = sbr.rel (0) target = $region5
    $region4: #{bert_classifier_forward.25} parent=1 // pred_region
      _
    $region5: #{bert_classifier_forward.25} parent=1 // pred_fallthru
      _
    // Predicated region
    $region6: #{bert_classifier_forward.25} parent=1 // pred_check
      _
    $region7: #{bert_classifier_forward.25} parent=1 // pred_check_branch
      %12 = sbr.rel (0) target = $region9
    $region8: #{bert_classifier_forward.25} parent=1 // pred_region
      _
    $region9: #{bert_classifier_forward.25} parent=1 // pred_fallthru
      _
    // Predicated region
    $region10: #{bert_classifier_forward.25} parent=1 // pred_check
      _
    $region11: #{bert_classifier_forward.25} parent=1 // pred_check_branch
      %14 = sbr.rel (0) target = $region13
    $region12: #{bert_classifier_forward.25} parent=1 // pred_region
      _
    $region13: #{bert_classifier_forward.25} parent=1 // pred_fallthru
      _
    %v16 = vld [vmem:[%s0] sm:$0x1]
    %v17 = vld [vmem:[%s1] sm:$0xf]
    %v18 = vld [vmem:[%s1 + $0x4] sm:$0xf]
    %v19 = vld [vmem:[%s1 + $0x8] sm:$0xf]
    %v20 = vld [vmem:[%s1 + $0xc] sm:$0xf]
    %v21 = vld [vmem:[%s2] sm:$0x1]
    %v23 = vlaneseq
    %v24 = vshrl.u32 %v23, 7
    %v25 = vsub.s32 0, %v24
    %v26 = vrot.slane %v21, %v25
    %v32 = vunpack.c.l.b16 %v17
    %v33 = vunpack.c.l.b16 %v18
    %v34 = vunpack.c.l.b16 %v19
    %v35 = vunpack.c.l.b16 %v20
    %v36 = vpack.c.b16 %v33, %v32
    %v37 = vpack.c.b16 %v35, %v34
    %vm40 = vcmask 261120
    %v42 = vsel %vm40, %v16, 0
    %44 = vmatprep.subr.bf16.mxu0 0
    %45 = vmatpush1.bf16.msra.mxu0 %v36
    %46 = vmatprep.subr.bf16.mxu0 0
    %47 = vmatpush1.bf16.msra.mxu0 %v37
    %48 = vmatprep.subr.bf16.mxu0 0
    %49 = vmatpush1.bf16.msra.mxu0 0
    %50 = vmatprep.subr.bf16.mxu0 0
    %51 = vmatpush1.bf16.msra.mxu0 0
    %52 = vmatprep.subr.bf16.mxu0 0
    %53 = vmatpush1.bf16.msra.mxu0 0
    %54 = vmatprep.subr.bf16.mxu0 0
    %55 = vmatpush1.bf16.msra.mxu0 0
    %56 = vmatprep.subr.bf16.mxu0 0
    %57 = vmatpush1.bf16.msra.mxu0 0
    %58 = vmatprep.subr.bf16.mxu0 0
    %59 = vmatpush1.bf16.msra.mxu0 0
    %60 = vmatprep.subr.bf16.mxu0 0
    %61 = vmatpush1.bf16.msra.mxu0 0
    %62 = vmatprep.subr.bf16.mxu0 0
    %63 = vmatpush1.bf16.msra.mxu0 0
    %64 = vmatprep.subr.bf16.mxu0 0
    %65 = vmatpush1.bf16.msra.mxu0 0
    %66 = vmatprep.subr.bf16.mxu0 0
    %67 = vmatpush1.bf16.msra.mxu0 0
    %68 = vmatprep.subr.bf16.mxu0 0
    %69 = vmatpush1.bf16.msra.mxu0 0
    %70 = vmatprep.subr.bf16.mxu0 0
    %71 = vmatpush1.bf16.msra.mxu0 0
    %72 = vmatprep.subr.bf16.mxu0 0
    %73 = vmatpush1.bf16.msra.mxu0 0
    %74 = vmatprep.subr.bf16.mxu0 0
    %75 = vmatpush1.bf16.msra.mxu0 0
    %76 = vmatprep.mubr.bf16.mxu0 0
    %77 = vmatmul.mubr.bf16.gmra.mrb[0].mxu0 %v42
    %v78 = vpop.f32.mrb[0].mxu0
    %v79 = vadd.f32 %v26, %v78
    %v80 = vpop.f32.mrb[0].mxu0
    %v81 = vpop.f32.mrb[0].mxu0
    %v82 = vpop.f32.mrb[0].mxu0
    %83 = vdwg.mxu0
    %84 = vst [vmem:[#allocation2] sm:$0x3] %v79
    // Predicated region
    $region14: #{bert_classifier_forward.25} parent=1 // pred_check
      _
    $region15: #{bert_classifier_forward.25} parent=1 // pred_check_branch
      %86 = sbr.rel (0) target = $region17
    $region16: #{bert_classifier_forward.25} parent=1 // pred_region
      %s88 = ssub.s32 32, 32
      %89 = vsyncadd [#allocation3], %s88
      %s91 = sshll.u32 [#allocation2], 4
      %s92 = int_to_ptr.vmem [resolvable:$true] %s91
      %94 = dma.vmem_to_hbm [thread:$0]  %s92, 32, %s3, [#allocation3]
    $region17: #{bert_classifier_forward.25} parent=1 // pred_fallthru
      _
    // Predicated region
    $region18: #{bert_classifier_forward.25} parent=1 // pred_check
      _
    $region19: #{bert_classifier_forward.25} parent=1 // pred_check_branch
      %96 = sbr.rel (0) target = $region21
    $region20: #{bert_classifier_forward.25} parent=1 // pred_region
      %97 = dma.done [#allocation3], 32
    $region21: #{bert_classifier_forward.25} parent=1 // pred_fallthru
      _
    %98 = vsyncpa [#allocation3], 1

</llo_original>
